<compile_context>
chip_gen: v6e
topology: v6e:2x2x1
jax: 0.10.0
libtpu: 0.0.40
codegen_flags: <defaults>
</compile_context>

<pallas_src>
import jax
import jax.numpy as jnp
from jax.experimental import pallas as pl
from jax.experimental.pallas import tpu as pltpu


def _chunk_size(T):
    """Largest divisor of T that is <= 8 (static unroll factor)."""
    for u in range(min(T, 8), 0, -1):
        if T % u == 0:
            return u
    return 1


def pose_decoder_kernel(h0_ref, pose0_ref, w_fused_ref, lat_bias_ref,
                        out_ref, h_out_ref, c_out_ref):
    """Whole autoregressive rollout in one kernel invocation.

    Shapes (all f32):
      h0_ref:       (V, H)        initial h (== initial c)
      pose0_ref:    (V, D)        box[0]
      w_fused_ref:  (H, 8H)       [Wx | Whh] with gate cols permuted to [i,f,o,g]
      lat_bias_ref: (V, 4H)       latent @ W_lat^T + b_ih + b_hh (permuted)
      out_ref:      (C, V, U*D)   lane-dense trajectory, C = T // U
    """
    C, V, UD = out_ref.shape
    H = h0_ref.shape[-1]
    D = pose0_ref.shape[-1]
    U = UD // D
    G = 4 * H  # gate width

    # One-time carry initialization (outside the recurrence hot path).
    h0 = h0_ref[...].astype(jnp.float32)
    c0 = h0
    pose0 = pose0_ref[...].astype(jnp.float32)

    # Loop-invariant operands, loaded once.
    w_fused = w_fused_ref[...]      # (H, 8H)
    lat_bias = lat_bias_ref[...]    # (V, 4H)

    # Accumulator invariant at every step entry: a_pose == (pose - h) @ Wx.
    a_pose0 = jnp.dot(pose0 - h0, w_fused[:, :G],
                      preferred_element_type=jnp.float32)

    def chunk(ci, carry):
        h, c, pose, a_pose = carry
        for u in range(U):                       # static unroll, U <= 8
            # Single lane-dense MXU dot per step: B = h @ [Wx | Whh] -> (V, 8H)
            b = jnp.dot(h, w_fused, preferred_element_type=jnp.float32)
            # gates = pose@Wx + h@Whh + lat_bias, via the accumulator identity.
            gates = a_pose + b[:, :G] + b[:, G:] + lat_bias          # (V, 4H)

            # Permuted gate order [i, f, o, g]: one wide sigmoid + one tanh.
            sig = jax.nn.sigmoid(gates[:, :3 * H])
            i_g = sig[:, 0 * H:1 * H]
            f_g = sig[:, 1 * H:2 * H]
            o_g = sig[:, 2 * H:3 * H]
            g_g = jnp.tanh(gates[:, 3 * H:])

            c = f_g * c + i_g * g_g
            h = o_g * jnp.tanh(c)                # == vel
            a_pose = a_pose + b[:, :G]           # == (pose_new - h_new) @ Wx
            pose = h + pose                      # pose = vel + pose

            # Static lane slice (u is a Python int) into the lane-dense output.
            out_ref[ci, :, u * D:(u + 1) * D] = pose.astype(out_ref.dtype)
        return h, c, pose, a_pose

    h_f, c_f, _, _ = jax.lax.fori_loop(0, C, chunk, (h0, c0, pose0, a_pose0))

    h_out_ref[...] = h_f.astype(h_out_ref.dtype)
    c_out_ref[...] = c_f.astype(c_out_ref.dtype)


def _perm_gates(m):
    """Permute PyTorch LSTM gate blocks [i, f, g, o] -> [i, f, o, g] (axis 0)."""
    H = m.shape[0] // 4
    return jnp.concatenate([m[:2 * H], m[3 * H:4 * H], m[2 * H:3 * H]], axis=0)


def prepare_pose_decoder_params(params, latent, D):
    """Time-invariant prep; reuse across calls when params/latent are fixed."""
    w_ih, w_hh, b_ih, b_hh = params      # torch: (4H, D+L), (4H, H), (4H,), (4H,)
    H = w_hh.shape[1]
    assert D == H, "out_nc must equal D for `vel + pose` to broadcast"

    w_ih_p = _perm_gates(w_ih).astype(jnp.float32)
    w_hh_p = _perm_gates(w_hh).astype(jnp.float32)
    bias_p = _perm_gates((b_ih + b_hh)).astype(jnp.float32)

    w_x = w_ih_p[:, :D].T                                   # (D, 4H)
    w_lat = w_ih_p[:, D:].T                                 # (L, 4H)
    w_fused = jnp.concatenate([w_x, w_hh_p.T], axis=1)      # (H, 8H)
    lat_bias = latent.astype(jnp.float32) @ w_lat + bias_p[None, :]   # (V, 4H)
    return w_fused, lat_bias


def pose_decoder_forward(hid, box, latent, params, prepared=None):
    """hid: (1, V, H), box: (T, V, D), latent: (V, L).  Requires H == D.

    Returns ((h, c), out) matching the PyTorch module:
      h, c: (1, V, H)     out: (T, V, D)
    """
    T, V, D = box.shape
    H = hid.shape[-1]
    assert H == D, "out_nc must equal D for `vel + pose` to broadcast"

    if prepared is None:
        prepared = prepare_pose_decoder_params(params, latent, D)
    w_fused, lat_bias = prepared

    U = _chunk_size(T)       # static inner unroll; out last dim = U*D lanes
    C = T // U

    h0 = hid[0]              # (V, H)
    pose0 = box[0]           # (V, D)

    out_flat, h_out, c_out = pl.pallas_call(
        pose_decoder_kernel,
        grid=(1,),
        in_specs=[
            pl.BlockSpec((V, H), lambda i: (0, 0)),              # h0 (== c0)
            pl.BlockSpec((V, D), lambda i: (0, 0)),              # box[0]
            pl.BlockSpec((H, 8 * H), lambda i: (0, 0)),          # fused [Wx|Whh]
            pl.BlockSpec((V, 4 * H), lambda i: (0, 0)),          # latent bias
        ],
        out_specs=[
            pl.BlockSpec((C, V, U * D), lambda i: (0, 0, 0)),    # lane-dense traj
            pl.BlockSpec((V, H), lambda i: (0, 0)),              # final h
            pl.BlockSpec((V, H), lambda i: (0, 0)),              # final c
        ],
        out_shape=[
            jax.ShapeDtypeStruct((C, V, U * D), box.dtype),
            jax.ShapeDtypeStruct((V, H), hid.dtype),
            jax.ShapeDtypeStruct((V, H), hid.dtype),
        ],
        compiler_params=pltpu.CompilerParams(
            dimension_semantics=("arbitrary",)),
    )(h0, pose0, w_fused, lat_bias)

    # Layout plumbing back to the module's (T, V, D) trajectory.
    out = (out_flat.reshape(C, V, U, D)
           .transpose(0, 2, 1, 3)
           .reshape(T, V, D))
    return (h_out[None], c_out[None]), out


def pose_decoder_reference(hid, box, latent, params):
    """Pure-JAX reference mirroring the PyTorch forward, for verification."""
    w_ih, w_hh, b_ih, b_hh = params
    T, V, D = box.shape
    H = hid.shape[-1]
    h = hid[0]
    c = hid[0]
    pose = box[0]
    outs = []
    for _ in range(T):
        inp = jnp.concatenate([pose, latent], axis=-1)
        gates = inp @ w_ih.T + h @ w_hh.T + b_ih + b_hh
        i = jax.nn.sigmoid(gates[:, :H])
        f = jax.nn.sigmoid(gates[:, H:2 * H])
        g = jnp.tanh(gates[:, 2 * H:3 * H])
        o = jax.nn.sigmoid(gates[:, 3 * H:])
        c = f * c + i * g
        h = o * jnp.tanh(c)
        pose = h + pose
        outs.append(pose)
    return (h[None], c[None]), jnp.stack(outs, axis=0)


if __name__ == "__main__":
    # Small shapes consistent with the forward: box (T, V, D), latent (V, L),
    # hid (1, V, H) with H == D (so vel + pose broadcasts), inp_nc = D + L.
    T, V, D, L = 8, 8, 16, 16
    H = D
    inp_nc = D + L

    key = jax.random.PRNGKey(0)
    k_hid, k_box, k_lat, k_wih, k_whh, k_bih, k_bhh = jax.random.split(key, 7)

    hid = jax.random.normal(k_hid, (1, V, H), dtype=jnp.float32)
    box = jax.random.normal(k_box, (T, V, D), dtype=jnp.float32)
    latent = jax.random.normal(k_lat, (V, L), dtype=jnp.float32)

    # Deterministic LSTM parameter init (PyTorch-style uniform(-1/sqrt(H), 1/sqrt(H)))
    bound = 1.0 / jnp.sqrt(jnp.float32(H))
    w_ih = jax.random.uniform(k_wih, (4 * H, inp_nc), minval=-bound, maxval=bound)
    w_hh = jax.random.uniform(k_whh, (4 * H, H), minval=-bound, maxval=bound)
    b_ih = jax.random.uniform(k_bih, (4 * H,), minval=-bound, maxval=bound)
    b_hh = jax.random.uniform(k_bhh, (4 * H,), minval=-bound, maxval=bound)
    params = (w_ih, w_hh, b_ih, b_hh)

    (h_k, c_k), out_k = pose_decoder_forward(hid, box, latent, params)
    jax.block_until_ready(out_k)

    (h_r, c_r), out_r = pose_decoder_reference(hid, box, latent, params)
    assert jnp.allclose(out_k, out_r, atol=1e-4, rtol=1e-4)
    assert jnp.allclose(h_k, h_r, atol=1e-4, rtol=1e-4)
    assert jnp.allclose(c_k, c_r, atol=1e-4, rtol=1e-4)

    print("KERNEL_OK")
</pallas_src>

<mosaic_0001>
module attributes {stable_mosaic.version = 11 : i64} {
  func.func @pose_decoder_kernel(%arg0: i32, %arg1: memref<8x16xf32, #tpu.memory_space<vmem>>, %arg2: memref<8x16xf32, #tpu.memory_space<vmem>>, %arg3: memref<16x128xf32, #tpu.memory_space<vmem>>, %arg4: memref<8x64xf32, #tpu.memory_space<vmem>>, %arg5: memref<1x8x128xf32, #tpu.memory_space<vmem>>, %arg6: memref<8x16xf32, #tpu.memory_space<vmem>>, %arg7: memref<8x16xf32, #tpu.memory_space<vmem>>) attributes {dimension_semantics = [#tpu.dimension_semantics<arbitrary>], iteration_bounds = array<i64: 1>, scalar_prefetch = 0 : i64, scratch_operands = 0 : i64, tpu.core_type = #tpu.core_type<tc>, window_params = [{pipeline_mode = #tpu.pipeline_mode<synchronous>, transform_indices = @transform_0, window_bounds = array<i64: 8, 16>}, {pipeline_mode = #tpu.pipeline_mode<synchronous>, transform_indices = @transform_1, window_bounds = array<i64: 8, 16>}, {pipeline_mode = #tpu.pipeline_mode<synchronous>, transform_indices = @transform_2, window_bounds = array<i64: 16, 128>}, {pipeline_mode = #tpu.pipeline_mode<synchronous>, transform_indices = @transform_3, window_bounds = array<i64: 8, 64>}, {pipeline_mode = #tpu.pipeline_mode<synchronous>, transform_indices = @transform_4, window_bounds = array<i64: 1, 8, 128>}, {pipeline_mode = #tpu.pipeline_mode<synchronous>, transform_indices = @transform_5, window_bounds = array<i64: 8, 16>}, {pipeline_mode = #tpu.pipeline_mode<synchronous>, transform_indices = @transform_6, window_bounds = array<i64: 8, 16>}]} {
    %c0 = arith.constant 0 : index
    %c0_0 = arith.constant 0 : index
    %0 = vector.load %arg1[%c0, %c0_0] : memref<8x16xf32, #tpu.memory_space<vmem>>, vector<8x16xf32>
    %c0_1 = arith.constant 0 : index
    %c0_2 = arith.constant 0 : index
    %1 = vector.load %arg2[%c0_1, %c0_2] : memref<8x16xf32, #tpu.memory_space<vmem>>, vector<8x16xf32>
    %c0_3 = arith.constant 0 : index
    %c0_4 = arith.constant 0 : index
    %2 = vector.load %arg3[%c0_3, %c0_4] : memref<16x128xf32, #tpu.memory_space<vmem>>, vector<16x128xf32>
    %c0_5 = arith.constant 0 : index
    %c0_6 = arith.constant 0 : index
    %3 = vector.load %arg4[%c0_5, %c0_6] : memref<8x64xf32, #tpu.memory_space<vmem>>, vector<8x64xf32>
    %4 = arith.subf %1, %0 : vector<8x16xf32>
    %5 = vector.extract_strided_slice %2 {offsets = [0, 0], sizes = [16, 64], strides = [1, 1]} : vector<16x128xf32> to vector<16x64xf32>
    %cst = arith.constant dense<0.000000e+00> : vector<8x64xf32>
    %6 = tpu.matmul %4, %5, %cst {dimension_numbers = #tpu.dot_dimension_numbers<[1], [0], [0], [1], [0, 0, 1, 1], [], []>} : vector<8x16xf32>, vector<16x64xf32>, vector<8x64xf32> -> vector<8x64xf32>
    %c0_i32 = arith.constant 0 : i32
    %cst_7 = arith.constant dense<0.000000e+00> : vector<8x128xf32>
    %7 = tpu.matmul %0, %2, %cst_7 {dimension_numbers = #tpu.dot_dimension_numbers<[1], [0], [0], [1], [0, 0, 1, 1], [], []>} : vector<8x16xf32>, vector<16x128xf32>, vector<8x128xf32> -> vector<8x128xf32>
    %8 = vector.extract_strided_slice %7 {offsets = [0, 0], sizes = [8, 64], strides = [1, 1]} : vector<8x128xf32> to vector<8x64xf32>
    %9 = arith.addf %6, %8 : vector<8x64xf32>
    %10 = vector.extract_strided_slice %7 {offsets = [0, 64], sizes = [8, 64], strides = [1, 1]} : vector<8x128xf32> to vector<8x64xf32>
    %11 = arith.addf %9, %10 : vector<8x64xf32>
    %12 = arith.addf %11, %3 : vector<8x64xf32>
    %13 = vector.extract_strided_slice %12 {offsets = [0, 0], sizes = [8, 48], strides = [1, 1]} : vector<8x64xf32> to vector<8x48xf32>
    %14 = arith.negf %13 : vector<8x48xf32>
    %15 = math.exp %14 : vector<8x48xf32>
    %cst_8 = arith.constant 1.000000e+00 : f32
    %16 = vector.broadcast %cst_8 : f32 to vector<8x48xf32>
    %17 = arith.addf %16, %15 : vector<8x48xf32>
    %18 = arith.divf %16, %17 : vector<8x48xf32>
    %19 = vector.extract_strided_slice %18 {offsets = [0, 0], sizes = [8, 16], strides = [1, 1]} : vector<8x48xf32> to vector<8x16xf32>
    %20 = vector.extract_strided_slice %18 {offsets = [0, 16], sizes = [8, 16], strides = [1, 1]} : vector<8x48xf32> to vector<8x16xf32>
    %21 = vector.extract_strided_slice %18 {offsets = [0, 32], sizes = [8, 16], strides = [1, 1]} : vector<8x48xf32> to vector<8x16xf32>
    %22 = vector.extract_strided_slice %12 {offsets = [0, 48], sizes = [8, 16], strides = [1, 1]} : vector<8x64xf32> to vector<8x16xf32>
    %23 = math.tanh %22 : vector<8x16xf32>
    %24 = arith.mulf %20, %0 : vector<8x16xf32>
    %25 = arith.mulf %19, %23 : vector<8x16xf32>
    %26 = arith.addf %24, %25 : vector<8x16xf32>
    %27 = math.tanh %26 : vector<8x16xf32>
    %28 = arith.mulf %21, %27 : vector<8x16xf32>
    %29 = vector.extract_strided_slice %7 {offsets = [0, 0], sizes = [8, 64], strides = [1, 1]} : vector<8x128xf32> to vector<8x64xf32>
    %30 = arith.addf %6, %29 : vector<8x64xf32>
    %31 = arith.addf %28, %1 : vector<8x16xf32>
    %32 = arith.index_cast %c0_i32 : i32 to index
    %c0_9 = arith.constant 0 : index
    %c0_10 = arith.constant 0 : index
    %33 = vector.load %arg5[%32, %c0_9, %c0_10] : memref<1x8x128xf32, #tpu.memory_space<vmem>>, vector<1x8x16xf32>
    %34 = vector.shape_cast %33 : vector<1x8x16xf32> to vector<8x16xf32>
    %35 = vector.shape_cast %31 : vector<8x16xf32> to vector<1x8x16xf32>
    tpu.vector_store %arg5[%32, %c0_9, %c0_10], %35 {strides = array<i32>} : memref<1x8x128xf32, #tpu.memory_space<vmem>>, vector<1x8x16xf32>,
    %cst_11 = arith.constant dense<0.000000e+00> : vector<8x128xf32>
    %36 = tpu.matmul %28, %2, %cst_11 {dimension_numbers = #tpu.dot_dimension_numbers<[1], [0], [0], [1], [0, 0, 1, 1], [], []>} : vector<8x16xf32>, vector<16x128xf32>, vector<8x128xf32> -> vector<8x128xf32>
    %37 = vector.extract_strided_slice %36 {offsets = [0, 0], sizes = [8, 64], strides = [1, 1]} : vector<8x128xf32> to vector<8x64xf32>
    %38 = arith.addf %30, %37 : vector<8x64xf32>
    %39 = vector.extract_strided_slice %36 {offsets = [0, 64], sizes = [8, 64], strides = [1, 1]} : vector<8x128xf32> to vector<8x64xf32>
    %40 = arith.addf %38, %39 : vector<8x64xf32>
    %41 = arith.addf %40, %3 : vector<8x64xf32>
    %42 = vector.extract_strided_slice %41 {offsets = [0, 0], sizes = [8, 48], strides = [1, 1]} : vector<8x64xf32> to vector<8x48xf32>
    %43 = arith.negf %42 : vector<8x48xf32>
    %44 = math.exp %43 : vector<8x48xf32>
    %cst_12 = arith.constant 1.000000e+00 : f32
    %45 = vector.broadcast %cst_12 : f32 to vector<8x48xf32>
    %46 = arith.addf %45, %44 : vector<8x48xf32>
    %47 = arith.divf %45, %46 : vector<8x48xf32>
    %48 = vector.extract_strided_slice %47 {offsets = [0, 0], sizes = [8, 16], strides = [1, 1]} : vector<8x48xf32> to vector<8x16xf32>
    %49 = vector.extract_strided_slice %47 {offsets = [0, 16], sizes = [8, 16], strides = [1, 1]} : vector<8x48xf32> to vector<8x16xf32>
    %50 = vector.extract_strided_slice %47 {offsets = [0, 32], sizes = [8, 16], strides = [1, 1]} : vector<8x48xf32> to vector<8x16xf32>
    %51 = vector.extract_strided_slice %41 {offsets = [0, 48], sizes = [8, 16], strides = [1, 1]} : vector<8x64xf32> to vector<8x16xf32>
    %52 = math.tanh %51 : vector<8x16xf32>
    %53 = arith.mulf %49, %26 : vector<8x16xf32>
    %54 = arith.mulf %48, %52 : vector<8x16xf32>
    %55 = arith.addf %53, %54 : vector<8x16xf32>
    %56 = math.tanh %55 : vector<8x16xf32>
    %57 = arith.mulf %50, %56 : vector<8x16xf32>
    %58 = vector.extract_strided_slice %36 {offsets = [0, 0], sizes = [8, 64], strides = [1, 1]} : vector<8x128xf32> to vector<8x64xf32>
    %59 = arith.addf %30, %58 : vector<8x64xf32>
    %60 = arith.addf %57, %31 : vector<8x16xf32>
    %61 = arith.index_cast %c0_i32 : i32 to index
    %c0_13 = arith.constant 0 : index
    %c16 = arith.constant 16 : index
    %62 = vector.load %arg5[%61, %c0_13, %c16] : memref<1x8x128xf32, #tpu.memory_space<vmem>>, vector<1x8x16xf32>
    %63 = vector.shape_cast %62 : vector<1x8x16xf32> to vector<8x16xf32>
    %64 = vector.shape_cast %60 : vector<8x16xf32> to vector<1x8x16xf32>
    tpu.vector_store %arg5[%61, %c0_13, %c16], %64 {strides = array<i32>} : memref<1x8x128xf32, #tpu.memory_space<vmem>>, vector<1x8x16xf32>,
    %cst_14 = arith.constant dense<0.000000e+00> : vector<8x128xf32>
    %65 = tpu.matmul %57, %2, %cst_14 {dimension_numbers = #tpu.dot_dimension_numbers<[1], [0], [0], [1], [0, 0, 1, 1], [], []>} : vector<8x16xf32>, vector<16x128xf32>, vector<8x128xf32> -> vector<8x128xf32>
    %66 = vector.extract_strided_slice %65 {offsets = [0, 0], sizes = [8, 64], strides = [1, 1]} : vector<8x128xf32> to vector<8x64xf32>
    %67 = arith.addf %59, %66 : vector<8x64xf32>
    %68 = vector.extract_strided_slice %65 {offsets = [0, 64], sizes = [8, 64], strides = [1, 1]} : vector<8x128xf32> to vector<8x64xf32>
    %69 = arith.addf %67, %68 : vector<8x64xf32>
    %70 = arith.addf %69, %3 : vector<8x64xf32>
    %71 = vector.extract_strided_slice %70 {offsets = [0, 0], sizes = [8, 48], strides = [1, 1]} : vector<8x64xf32> to vector<8x48xf32>
    %72 = arith.negf %71 : vector<8x48xf32>
    %73 = math.exp %72 : vector<8x48xf32>
    %cst_15 = arith.constant 1.000000e+00 : f32
    %74 = vector.broadcast %cst_15 : f32 to vector<8x48xf32>
    %75 = arith.addf %74, %73 : vector<8x48xf32>
    %76 = arith.divf %74, %75 : vector<8x48xf32>
    %77 = vector.extract_strided_slice %76 {offsets = [0, 0], sizes = [8, 16], strides = [1, 1]} : vector<8x48xf32> to vector<8x16xf32>
    %78 = vector.extract_strided_slice %76 {offsets = [0, 16], sizes = [8, 16], strides = [1, 1]} : vector<8x48xf32> to vector<8x16xf32>
    %79 = vector.extract_strided_slice %76 {offsets = [0, 32], sizes = [8, 16], strides = [1, 1]} : vector<8x48xf32> to vector<8x16xf32>
    %80 = vector.extract_strided_slice %70 {offsets = [0, 48], sizes = [8, 16], strides = [1, 1]} : vector<8x64xf32> to vector<8x16xf32>
    %81 = math.tanh %80 : vector<8x16xf32>
    %82 = arith.mulf %78, %55 : vector<8x16xf32>
    %83 = arith.mulf %77, %81 : vector<8x16xf32>
    %84 = arith.addf %82, %83 : vector<8x16xf32>
    %85 = math.tanh %84 : vector<8x16xf32>
    %86 = arith.mulf %79, %85 : vector<8x16xf32>
    %87 = vector.extract_strided_slice %65 {offsets = [0, 0], sizes = [8, 64], strides = [1, 1]} : vector<8x128xf32> to vector<8x64xf32>
    %88 = arith.addf %59, %87 : vector<8x64xf32>
    %89 = arith.addf %86, %60 : vector<8x16xf32>
    %90 = arith.index_cast %c0_i32 : i32 to index
    %c0_16 = arith.constant 0 : index
    %c32 = arith.constant 32 : index
    %91 = vector.load %arg5[%90, %c0_16, %c32] : memref<1x8x128xf32, #tpu.memory_space<vmem>>, vector<1x8x16xf32>
    %92 = vector.shape_cast %91 : vector<1x8x16xf32> to vector<8x16xf32>
    %93 = vector.shape_cast %89 : vector<8x16xf32> to vector<1x8x16xf32>
    tpu.vector_store %arg5[%90, %c0_16, %c32], %93 {strides = array<i32>} : memref<1x8x128xf32, #tpu.memory_space<vmem>>, vector<1x8x16xf32>,
    %cst_17 = arith.constant dense<0.000000e+00> : vector<8x128xf32>
    %94 = tpu.matmul %86, %2, %cst_17 {dimension_numbers = #tpu.dot_dimension_numbers<[1], [0], [0], [1], [0, 0, 1, 1], [], []>} : vector<8x16xf32>, vector<16x128xf32>, vector<8x128xf32> -> vector<8x128xf32>
    %95 = vector.extract_strided_slice %94 {offsets = [0, 0], sizes = [8, 64], strides = [1, 1]} : vector<8x128xf32> to vector<8x64xf32>
    %96 = arith.addf %88, %95 : vector<8x64xf32>
    %97 = vector.extract_strided_slice %94 {offsets = [0, 64], sizes = [8, 64], strides = [1, 1]} : vector<8x128xf32> to vector<8x64xf32>
    %98 = arith.addf %96, %97 : vector<8x64xf32>
    %99 = arith.addf %98, %3 : vector<8x64xf32>
    %100 = vector.extract_strided_slice %99 {offsets = [0, 0], sizes = [8, 48], strides = [1, 1]} : vector<8x64xf32> to vector<8x48xf32>
    %101 = arith.negf %100 : vector<8x48xf32>
    %102 = math.exp %101 : vector<8x48xf32>
    %cst_18 = arith.constant 1.000000e+00 : f32
    %103 = vector.broadcast %cst_18 : f32 to vector<8x48xf32>
    %104 = arith.addf %103, %102 : vector<8x48xf32>
    %105 = arith.divf %103, %104 : vector<8x48xf32>
    %106 = vector.extract_strided_slice %105 {offsets = [0, 0], sizes = [8, 16], strides = [1, 1]} : vector<8x48xf32> to vector<8x16xf32>
    %107 = vector.extract_strided_slice %105 {offsets = [0, 16], sizes = [8, 16], strides = [1, 1]} : vector<8x48xf32> to vector<8x16xf32>
    %108 = vector.extract_strided_slice %105 {offsets = [0, 32], sizes = [8, 16], strides = [1, 1]} : vector<8x48xf32> to vector<8x16xf32>
    %109 = vector.extract_strided_slice %99 {offsets = [0, 48], sizes = [8, 16], strides = [1, 1]} : vector<8x64xf32> to vector<8x16xf32>
    %110 = math.tanh %109 : vector<8x16xf32>
    %111 = arith.mulf %107, %84 : vector<8x16xf32>
    %112 = arith.mulf %106, %110 : vector<8x16xf32>
    %113 = arith.addf %111, %112 : vector<8x16xf32>
    %114 = math.tanh %113 : vector<8x16xf32>
    %115 = arith.mulf %108, %114 : vector<8x16xf32>
    %116 = vector.extract_strided_slice %94 {offsets = [0, 0], sizes = [8, 64], strides = [1, 1]} : vector<8x128xf32> to vector<8x64xf32>
    %117 = arith.addf %88, %116 : vector<8x64xf32>
    %118 = arith.addf %115, %89 : vector<8x16xf32>
    %119 = arith.index_cast %c0_i32 : i32 to index
    %c0_19 = arith.constant 0 : index
    %c48 = arith.constant 48 : index
    %120 = vector.load %arg5[%119, %c0_19, %c48] : memref<1x8x128xf32, #tpu.memory_space<vmem>>, vector<1x8x16xf32>
    %121 = vector.shape_cast %120 : vector<1x8x16xf32> to vector<8x16xf32>
    %122 = vector.shape_cast %118 : vector<8x16xf32> to vector<1x8x16xf32>
    tpu.vector_store %arg5[%119, %c0_19, %c48], %122 {strides = array<i32>} : memref<1x8x128xf32, #tpu.memory_space<vmem>>, vector<1x8x16xf32>,
    %cst_20 = arith.constant dense<0.000000e+00> : vector<8x128xf32>
    %123 = tpu.matmul %115, %2, %cst_20 {dimension_numbers = #tpu.dot_dimension_numbers<[1], [0], [0], [1], [0, 0, 1, 1], [], []>} : vector<8x16xf32>, vector<16x128xf32>, vector<8x128xf32> -> vector<8x128xf32>
    %124 = vector.extract_strided_slice %123 {offsets = [0, 0], sizes = [8, 64], strides = [1, 1]} : vector<8x128xf32> to vector<8x64xf32>
    %125 = arith.addf %117, %124 : vector<8x64xf32>
    %126 = vector.extract_strided_slice %123 {offsets = [0, 64], sizes = [8, 64], strides = [1, 1]} : vector<8x128xf32> to vector<8x64xf32>
    %127 = arith.addf %125, %126 : vector<8x64xf32>
    %128 = arith.addf %127, %3 : vector<8x64xf32>
    %129 = vector.extract_strided_slice %128 {offsets = [0, 0], sizes = [8, 48], strides = [1, 1]} : vector<8x64xf32> to vector<8x48xf32>
    %130 = arith.negf %129 : vector<8x48xf32>
    %131 = math.exp %130 : vector<8x48xf32>
    %cst_21 = arith.constant 1.000000e+00 : f32
    %132 = vector.broadcast %cst_21 : f32 to vector<8x48xf32>
    %133 = arith.addf %132, %131 : vector<8x48xf32>
    %134 = arith.divf %132, %133 : vector<8x48xf32>
    %135 = vector.extract_strided_slice %134 {offsets = [0, 0], sizes = [8, 16], strides = [1, 1]} : vector<8x48xf32> to vector<8x16xf32>
    %136 = vector.extract_strided_slice %134 {offsets = [0, 16], sizes = [8, 16], strides = [1, 1]} : vector<8x48xf32> to vector<8x16xf32>
    %137 = vector.extract_strided_slice %134 {offsets = [0, 32], sizes = [8, 16], strides = [1, 1]} : vector<8x48xf32> to vector<8x16xf32>
    %138 = vector.extract_strided_slice %128 {offsets = [0, 48], sizes = [8, 16], strides = [1, 1]} : vector<8x64xf32> to vector<8x16xf32>
    %139 = math.tanh %138 : vector<8x16xf32>
    %140 = arith.mulf %136, %113 : vector<8x16xf32>
    %141 = arith.mulf %135, %139 : vector<8x16xf32>
    %142 = arith.addf %140, %141 : vector<8x16xf32>
    %143 = math.tanh %142 : vector<8x16xf32>
    %144 = arith.mulf %137, %143 : vector<8x16xf32>
    %145 = vector.extract_strided_slice %123 {offsets = [0, 0], sizes = [8, 64], strides = [1, 1]} : vector<8x128xf32> to vector<8x64xf32>
    %146 = arith.addf %117, %145 : vector<8x64xf32>
    %147 = arith.addf %144, %118 : vector<8x16xf32>
    %148 = arith.index_cast %c0_i32 : i32 to index
    %c0_22 = arith.constant 0 : index
    %c64 = arith.constant 64 : index
    %149 = vector.load %arg5[%148, %c0_22, %c64] : memref<1x8x128xf32, #tpu.memory_space<vmem>>, vector<1x8x16xf32>
    %150 = vector.shape_cast %149 : vector<1x8x16xf32> to vector<8x16xf32>
    %151 = vector.shape_cast %147 : vector<8x16xf32> to vector<1x8x16xf32>
    tpu.vector_store %arg5[%148, %c0_22, %c64], %151 {strides = array<i32>} : memref<1x8x128xf32, #tpu.memory_space<vmem>>, vector<1x8x16xf32>,
    %cst_23 = arith.constant dense<0.000000e+00> : vector<8x128xf32>
    %152 = tpu.matmul %144, %2, %cst_23 {dimension_numbers = #tpu.dot_dimension_numbers<[1], [0], [0], [1], [0, 0, 1, 1], [], []>} : vector<8x16xf32>, vector<16x128xf32>, vector<8x128xf32> -> vector<8x128xf32>
    %153 = vector.extract_strided_slice %152 {offsets = [0, 0], sizes = [8, 64], strides = [1, 1]} : vector<8x128xf32> to vector<8x64xf32>
    %154 = arith.addf %146, %153 : vector<8x64xf32>
    %155 = vector.extract_strided_slice %152 {offsets = [0, 64], sizes = [8, 64], strides = [1, 1]} : vector<8x128xf32> to vector<8x64xf32>
    %156 = arith.addf %154, %155 : vector<8x64xf32>
    %157 = arith.addf %156, %3 : vector<8x64xf32>
    %158 = vector.extract_strided_slice %157 {offsets = [0, 0], sizes = [8, 48], strides = [1, 1]} : vector<8x64xf32> to vector<8x48xf32>
    %159 = arith.negf %158 : vector<8x48xf32>
    %160 = math.exp %159 : vector<8x48xf32>
    %cst_24 = arith.constant 1.000000e+00 : f32
    %161 = vector.broadcast %cst_24 : f32 to vector<8x48xf32>
    %162 = arith.addf %161, %160 : vector<8x48xf32>
    %163 = arith.divf %161, %162 : vector<8x48xf32>
    %164 = vector.extract_strided_slice %163 {offsets = [0, 0], sizes = [8, 16], strides = [1, 1]} : vector<8x48xf32> to vector<8x16xf32>
    %165 = vector.extract_strided_slice %163 {offsets = [0, 16], sizes = [8, 16], strides = [1, 1]} : vector<8x48xf32> to vector<8x16xf32>
    %166 = vector.extract_strided_slice %163 {offsets = [0, 32], sizes = [8, 16], strides = [1, 1]} : vector<8x48xf32> to vector<8x16xf32>
    %167 = vector.extract_strided_slice %157 {offsets = [0, 48], sizes = [8, 16], strides = [1, 1]} : vector<8x64xf32> to vector<8x16xf32>
    %168 = math.tanh %167 : vector<8x16xf32>
    %169 = arith.mulf %165, %142 : vector<8x16xf32>
    %170 = arith.mulf %164, %168 : vector<8x16xf32>
    %171 = arith.addf %169, %170 : vector<8x16xf32>
    %172 = math.tanh %171 : vector<8x16xf32>
    %173 = arith.mulf %166, %172 : vector<8x16xf32>
    %174 = vector.extract_strided_slice %152 {offsets = [0, 0], sizes = [8, 64], strides = [1, 1]} : vector<8x128xf32> to vector<8x64xf32>
    %175 = arith.addf %146, %174 : vector<8x64xf32>
    %176 = arith.addf %173, %147 : vector<8x16xf32>
    %177 = arith.index_cast %c0_i32 : i32 to index
    %c0_25 = arith.constant 0 : index
    %c80 = arith.constant 80 : index
    %178 = vector.load %arg5[%177, %c0_25, %c80] : memref<1x8x128xf32, #tpu.memory_space<vmem>>, vector<1x8x16xf32>
    %179 = vector.shape_cast %178 : vector<1x8x16xf32> to vector<8x16xf32>
    %180 = vector.shape_cast %176 : vector<8x16xf32> to vector<1x8x16xf32>
    tpu.vector_store %arg5[%177, %c0_25, %c80], %180 {strides = array<i32>} : memref<1x8x128xf32, #tpu.memory_space<vmem>>, vector<1x8x16xf32>,
    %cst_26 = arith.constant dense<0.000000e+00> : vector<8x128xf32>
    %181 = tpu.matmul %173, %2, %cst_26 {dimension_numbers = #tpu.dot_dimension_numbers<[1], [0], [0], [1], [0, 0, 1, 1], [], []>} : vector<8x16xf32>, vector<16x128xf32>, vector<8x128xf32> -> vector<8x128xf32>
    %182 = vector.extract_strided_slice %181 {offsets = [0, 0], sizes = [8, 64], strides = [1, 1]} : vector<8x128xf32> to vector<8x64xf32>
    %183 = arith.addf %175, %182 : vector<8x64xf32>
    %184 = vector.extract_strided_slice %181 {offsets = [0, 64], sizes = [8, 64], strides = [1, 1]} : vector<8x128xf32> to vector<8x64xf32>
    %185 = arith.addf %183, %184 : vector<8x64xf32>
    %186 = arith.addf %185, %3 : vector<8x64xf32>
    %187 = vector.extract_strided_slice %186 {offsets = [0, 0], sizes = [8, 48], strides = [1, 1]} : vector<8x64xf32> to vector<8x48xf32>
    %188 = arith.negf %187 : vector<8x48xf32>
    %189 = math.exp %188 : vector<8x48xf32>
    %cst_27 = arith.constant 1.000000e+00 : f32
    %190 = vector.broadcast %cst_27 : f32 to vector<8x48xf32>
    %191 = arith.addf %190, %189 : vector<8x48xf32>
    %192 = arith.divf %190, %191 : vector<8x48xf32>
    %193 = vector.extract_strided_slice %192 {offsets = [0, 0], sizes = [8, 16], strides = [1, 1]} : vector<8x48xf32> to vector<8x16xf32>
    %194 = vector.extract_strided_slice %192 {offsets = [0, 16], sizes = [8, 16], strides = [1, 1]} : vector<8x48xf32> to vector<8x16xf32>
    %195 = vector.extract_strided_slice %192 {offsets = [0, 32], sizes = [8, 16], strides = [1, 1]} : vector<8x48xf32> to vector<8x16xf32>
    %196 = vector.extract_strided_slice %186 {offsets = [0, 48], sizes = [8, 16], strides = [1, 1]} : vector<8x64xf32> to vector<8x16xf32>
    %197 = math.tanh %196 : vector<8x16xf32>
    %198 = arith.mulf %194, %171 : vector<8x16xf32>
    %199 = arith.mulf %193, %197 : vector<8x16xf32>
    %200 = arith.addf %198, %199 : vector<8x16xf32>
    %201 = math.tanh %200 : vector<8x16xf32>
    %202 = arith.mulf %195, %201 : vector<8x16xf32>
    %203 = vector.extract_strided_slice %181 {offsets = [0, 0], sizes = [8, 64], strides = [1, 1]} : vector<8x128xf32> to vector<8x64xf32>
    %204 = arith.addf %175, %203 : vector<8x64xf32>
    %205 = arith.addf %202, %176 : vector<8x16xf32>
    %206 = arith.index_cast %c0_i32 : i32 to index
    %c0_28 = arith.constant 0 : index
    %c96 = arith.constant 96 : index
    %207 = vector.load %arg5[%206, %c0_28, %c96] : memref<1x8x128xf32, #tpu.memory_space<vmem>>, vector<1x8x16xf32>
    %208 = vector.shape_cast %207 : vector<1x8x16xf32> to vector<8x16xf32>
    %209 = vector.shape_cast %205 : vector<8x16xf32> to vector<1x8x16xf32>
    tpu.vector_store %arg5[%206, %c0_28, %c96], %209 {strides = array<i32>} : memref<1x8x128xf32, #tpu.memory_space<vmem>>, vector<1x8x16xf32>,
    %cst_29 = arith.constant dense<0.000000e+00> : vector<8x128xf32>
    %210 = tpu.matmul %202, %2, %cst_29 {dimension_numbers = #tpu.dot_dimension_numbers<[1], [0], [0], [1], [0, 0, 1, 1], [], []>} : vector<8x16xf32>, vector<16x128xf32>, vector<8x128xf32> -> vector<8x128xf32>
    %211 = vector.extract_strided_slice %210 {offsets = [0, 0], sizes = [8, 64], strides = [1, 1]} : vector<8x128xf32> to vector<8x64xf32>
    %212 = arith.addf %204, %211 : vector<8x64xf32>
    %213 = vector.extract_strided_slice %210 {offsets = [0, 64], sizes = [8, 64], strides = [1, 1]} : vector<8x128xf32> to vector<8x64xf32>
    %214 = arith.addf %212, %213 : vector<8x64xf32>
    %215 = arith.addf %214, %3 : vector<8x64xf32>
    %216 = vector.extract_strided_slice %215 {offsets = [0, 0], sizes = [8, 48], strides = [1, 1]} : vector<8x64xf32> to vector<8x48xf32>
    %217 = arith.negf %216 : vector<8x48xf32>
    %218 = math.exp %217 : vector<8x48xf32>
    %cst_30 = arith.constant 1.000000e+00 : f32
    %219 = vector.broadcast %cst_30 : f32 to vector<8x48xf32>
    %220 = arith.addf %219, %218 : vector<8x48xf32>
    %221 = arith.divf %219, %220 : vector<8x48xf32>
    %222 = vector.extract_strided_slice %221 {offsets = [0, 0], sizes = [8, 16], strides = [1, 1]} : vector<8x48xf32> to vector<8x16xf32>
    %223 = vector.extract_strided_slice %221 {offsets = [0, 16], sizes = [8, 16], strides = [1, 1]} : vector<8x48xf32> to vector<8x16xf32>
    %224 = vector.extract_strided_slice %221 {offsets = [0, 32], sizes = [8, 16], strides = [1, 1]} : vector<8x48xf32> to vector<8x16xf32>
    %225 = vector.extract_strided_slice %215 {offsets = [0, 48], sizes = [8, 16], strides = [1, 1]} : vector<8x64xf32> to vector<8x16xf32>
    %226 = math.tanh %225 : vector<8x16xf32>
    %227 = arith.mulf %223, %200 : vector<8x16xf32>
    %228 = arith.mulf %222, %226 : vector<8x16xf32>
    %229 = arith.addf %227, %228 : vector<8x16xf32>
    %230 = math.tanh %229 : vector<8x16xf32>
    %231 = arith.mulf %224, %230 : vector<8x16xf32>
    %232 = vector.extract_strided_slice %210 {offsets = [0, 0], sizes = [8, 64], strides = [1, 1]} : vector<8x128xf32> to vector<8x64xf32>
    %233 = arith.addf %204, %232 : vector<8x64xf32>
    %234 = arith.addf %231, %205 : vector<8x16xf32>
    %235 = arith.index_cast %c0_i32 : i32 to index
    %c0_31 = arith.constant 0 : index
    %c112 = arith.constant 112 : index
    %236 = vector.load %arg5[%235, %c0_31, %c112] : memref<1x8x128xf32, #tpu.memory_space<vmem>>, vector<1x8x16xf32>
    %237 = vector.shape_cast %236 : vector<1x8x16xf32> to vector<8x16xf32>
    %238 = vector.shape_cast %234 : vector<8x16xf32> to vector<1x8x16xf32>
    tpu.vector_store %arg5[%235, %c0_31, %c112], %238 {strides = array<i32>} : memref<1x8x128xf32, #tpu.memory_space<vmem>>, vector<1x8x16xf32>,
    %c1_i32 = arith.constant 1 : i32
    %c0_32 = arith.constant 0 : index
    %c0_33 = arith.constant 0 : index
    %239 = vector.load %arg6[%c0_32, %c0_33] : memref<8x16xf32, #tpu.memory_space<vmem>>, vector<8x16xf32>
    tpu.vector_store %arg6[%c0_32, %c0_33], %231 {strides = array<i32>} : memref<8x16xf32, #tpu.memory_space<vmem>>, vector<8x16xf32>,
    %c0_34 = arith.constant 0 : index
    %c0_35 = arith.constant 0 : index
    %240 = vector.load %arg7[%c0_34, %c0_35] : memref<8x16xf32, #tpu.memory_space<vmem>>, vector<8x16xf32>
    tpu.vector_store %arg7[%c0_34, %c0_35], %229 {strides = array<i32>} : memref<8x16xf32, #tpu.memory_space<vmem>>, vector<8x16xf32>,
    return
  }
  func.func @transform_0(%arg0: i32) -> (i32, i32) {
    %c0_i32 = arith.constant 0 : i32
    %c0_i32_0 = arith.constant 0 : i32
    %c0_i32_1 = arith.constant 0 : i32
    return %c0_i32, %c0_i32_0 : i32, i32
  }
  func.func @transform_1(%arg0: i32) -> (i32, i32) {
    %c0_i32 = arith.constant 0 : i32
    %c0_i32_0 = arith.constant 0 : i32
    %c0_i32_1 = arith.constant 0 : i32
    return %c0_i32, %c0_i32_0 : i32, i32
  }
  func.func @transform_2(%arg0: i32) -> (i32, i32) {
    %c0_i32 = arith.constant 0 : i32
    %c0_i32_0 = arith.constant 0 : i32
    %c0_i32_1 = arith.constant 0 : i32
    return %c0_i32, %c0_i32_0 : i32, i32
  }
  func.func @transform_3(%arg0: i32) -> (i32, i32) {
    %c0_i32 = arith.constant 0 : i32
    %c0_i32_0 = arith.constant 0 : i32
    %c0_i32_1 = arith.constant 0 : i32
    return %c0_i32, %c0_i32_0 : i32, i32
  }
  func.func @transform_4(%arg0: i32) -> (i32, i32, i32) {
    %c0_i32 = arith.constant 0 : i32
    %c0_i32_0 = arith.constant 0 : i32
    %c0_i32_1 = arith.constant 0 : i32
    %c0_i32_2 = arith.constant 0 : i32
    return %c0_i32, %c0_i32_0, %c0_i32_1 : i32, i32, i32
  }
  func.func @transform_5(%arg0: i32) -> (i32, i32) {
    %c0_i32 = arith.constant 0 : i32
    %c0_i32_0 = arith.constant 0 : i32
    %c0_i32_1 = arith.constant 0 : i32
    return %c0_i32, %c0_i32_0 : i32, i32
  }
  func.func @transform_6(%arg0: i32) -> (i32, i32) {
    %c0_i32 = arith.constant 0 : i32
    %c0_i32_0 = arith.constant 0 : i32
    %c0_i32_1 = arith.constant 0 : i32
    return %c0_i32, %c0_i32_0 : i32, i32
  }
}

</mosaic_0001>

<llo_original>
// kernel: tpu_custom_call.1
$region0: #{tpu_custom_call.1}
  #allocation0 [shape = 'u32[]', space=smem, size = 0x4, offset = 0x4, fixed_abs, tag = 'smem constant byte address 0x4 - core index']
  #allocation1 [shape = 'u32[144,128]{1,0:T(1,128)}', space=vmem, size = 0x12000, scoped, tag = 'internal scratch']
  %s0 = inlined_call_operand.hbm [shape: f32[8,16], index: 0, kind: input, shape index: {}]
  %s1 = inlined_call_operand.hbm [shape: f32[8,16], index: 1, kind: input, shape index: {}]
  %s2 = inlined_call_operand.hbm [shape: f32[16,128], index: 2, kind: input, shape index: {}]
  %s3 = inlined_call_operand.hbm [shape: f32[8,64], index: 3, kind: input, shape index: {}]
  %s4 = inlined_call_operand.hbm [shape: f32[1,8,128], index: 4, kind: output, shape index: {0}]
  %s5 = inlined_call_operand.hbm [shape: f32[8,16], index: 5, kind: output, shape index: {1}]
  %s6 = inlined_call_operand.hbm [shape: f32[8,16], index: 6, kind: output, shape index: {2}]
  %7 = xla_tuple %s4, %s5, %s6
  %s8 = sld [smem:[#allocation0]]
  $region58: #{tpu_custom_call.1} parent=0
    _
  %s10 = ssub.s32 1, %s8
  %s11 = scalar_select 0, %s10, %s8
  $region1: #{tpu_custom_call.1} parent=0
    #allocation2 [shape = 'u8[4096]{0}', space=vmem, size = 0x1000, scoped, tag = 'input window, operand 0, single buffered']
    #allocation3 [shape = 's32[1]{0}', space=sflag, size = 0x4, scoped, tag = 'scoped memory for tpu_custom_call.1']
    #allocation4 [shape = 's32[1]{0}', space=sflag, size = 0x4, scoped, tag = 'scoped memory for tpu_custom_call.1']
    #allocation5 [shape = 'u8[4096]{0}', space=vmem, size = 0x1000, scoped, tag = 'input window, operand 1, single buffered']
    #allocation6 [shape = 's32[1]{0}', space=sflag, size = 0x4, scoped, tag = 'scoped memory for tpu_custom_call.1']
    #allocation7 [shape = 'u8[8192]{0}', space=vmem, size = 0x2000, scoped, tag = 'input window, operand 2, single buffered']
    #allocation8 [shape = 'u8[4096]{0}', space=vmem, size = 0x1000, scoped, tag = 'input window, operand 3, single buffered']
    #allocation9 [shape = 's32[1]{0}', space=sflag, size = 0x4, scoped, tag = 'scoped memory for tpu_custom_call.1']
    #allocation10 [shape = 'u8[4096]{0}', space=vmem, size = 0x1000, scoped, tag = 'output window, operand 0, single buffered']
    #allocation11 [shape = 'u8[4096]{0}', space=vmem, size = 0x1000, scoped, tag = 'output window, operand 1, single buffered']
    #allocation12 [shape = 's32[1]{0}', space=sflag, size = 0x4, scoped, tag = 'scoped memory for tpu_custom_call.1']
    #allocation13 [shape = 'u8[4096]{0}', space=vmem, size = 0x1000, scoped, tag = 'output window, operand 2, single buffered']
    %12 = vsyncpa [#allocation3], 0
    %13 = vsyncpa [#allocation6], 0
    %14 = vsyncpa [#allocation9], 0
    %15 = vsyncpa [#allocation4], 0
    %16 = vsyncpa [#allocation12], 0
    // Predicated region
    $region2: #{tpu_custom_call.1} parent=1 // pred_check
      _
    $region3: #{tpu_custom_call.1} parent=1 // pred_check_branch
      %18 = sbr.rel (0) target = $region5
    $region4: #{tpu_custom_call.1} parent=1 // pred_region
      %s20 = ssub.s32 128, 128
      %21 = vsyncadd [#allocation3], %s20
      %s23 = sshll.u32 [#allocation2], 4
      %s24 = int_to_ptr.vmem [resolvable:$true] %s23
      %26 = dma.hbm_to_vmem [thread:$0]  %s0, 128, %s24, [#allocation3]
    $region5: #{tpu_custom_call.1} parent=1 // pred_fallthru
      _
    // Predicated region
    $region6: #{tpu_custom_call.1} parent=1 // pred_check
      _
    $region7: #{tpu_custom_call.1} parent=1 // pred_check_branch
      %28 = sbr.rel (0) target = $region9
    $region8: #{tpu_custom_call.1} parent=1 // pred_region
      %s30 = ssub.s32 128, 128
      %31 = vsyncadd [#allocation6], %s30
      %s33 = sshll.u32 [#allocation5], 4
      %s34 = int_to_ptr.vmem [resolvable:$true] %s33
      %36 = dma.hbm_to_vmem [thread:$0]  %s1, 128, %s34, [#allocation6]
    $region9: #{tpu_custom_call.1} parent=1 // pred_fallthru
      _
    // Predicated region
    $region10: #{tpu_custom_call.1} parent=1 // pred_check
      _
    $region11: #{tpu_custom_call.1} parent=1 // pred_check_branch
      %38 = sbr.rel (0) target = $region13
    $region12: #{tpu_custom_call.1} parent=1 // pred_region
      %s40 = ssub.s32 256, 256
      %41 = vsyncadd [#allocation6], %s40
      %s42 = sshll.u32 [#allocation7], 4
      %s43 = int_to_ptr.vmem [resolvable:$true] %s42
      %48 = dma.hbm_to_vmem [thread:$0]  %s2, 256, %s43, [#allocation6], 128, 128, 8
    $region13: #{tpu_custom_call.1} parent=1 // pred_fallthru
      _
    // Predicated region
    $region14: #{tpu_custom_call.1} parent=1 // pred_check
      _
    $region15: #{tpu_custom_call.1} parent=1 // pred_check_branch
      %50 = sbr.rel (0) target = $region17
    $region16: #{tpu_custom_call.1} parent=1 // pred_region
      %s52 = ssub.s32 128, 128
      %53 = vsyncadd [#allocation9], %s52
      %s55 = sshll.u32 [#allocation8], 4
      %s56 = int_to_ptr.vmem [resolvable:$true] %s55
      %58 = dma.hbm_to_vmem [thread:$0]  %s3, 128, %s56, [#allocation9]
    $region17: #{tpu_custom_call.1} parent=1 // pred_fallthru
      _
    // Predicated region
    $region18: #{tpu_custom_call.1} parent=1 // pred_check
      _
    $region19: #{tpu_custom_call.1} parent=1 // pred_check_branch
      %60 = sbr.rel (0) target = $region21
    $region20: #{tpu_custom_call.1} parent=1 // pred_region
      %61 = dma.done [#allocation3], 128
    $region21: #{tpu_custom_call.1} parent=1 // pred_fallthru
      _
    // Predicated region
    $region22: #{tpu_custom_call.1} parent=1 // pred_check
      _
    $region23: #{tpu_custom_call.1} parent=1 // pred_check_branch
      %63 = sbr.rel (0) target = $region25
    $region24: #{tpu_custom_call.1} parent=1 // pred_region
      %64 = dma.done [#allocation6], 128
    $region25: #{tpu_custom_call.1} parent=1 // pred_fallthru
      _
    // Predicated region
    $region26: #{tpu_custom_call.1} parent=1 // pred_check
      _
    $region27: #{tpu_custom_call.1} parent=1 // pred_check_branch
      %66 = sbr.rel (0) target = $region29
    $region28: #{tpu_custom_call.1} parent=1 // pred_region
      %67 = dma.done [#allocation6], 256
    $region29: #{tpu_custom_call.1} parent=1 // pred_fallthru
      _
    // Predicated region
    $region30: #{tpu_custom_call.1} parent=1 // pred_check
      _
    $region31: #{tpu_custom_call.1} parent=1 // pred_check_branch
      %69 = sbr.rel (0) target = $region33
    $region32: #{tpu_custom_call.1} parent=1 // pred_region
      %70 = dma.done [#allocation9], 128
    $region33: #{tpu_custom_call.1} parent=1 // pred_fallthru
      _
    %v71 = vld [vmem:[#allocation2] sm:$0xff]
    %v72 = vld [vmem:[#allocation5] sm:$0xff]
    %v73 = vld [vmem:[#allocation7] sm:$0xff]
    %v74 = vld [vmem:[#allocation7 + $0x8] sm:$0xff]
    %v75 = vld [vmem:[#allocation8] sm:$0xff]
    %v76 = vsub.f32 %v72, %v71
    %vm77 = vcmask 130048
    %v79 = vsel %vm77, %v71, 0
    %81 = vmatprep.subr.mxu0 0.0
    %82 = vmatpush1.msra.mxu0 0.0
    %83 = vmatprep.subr.mxu0 0.0
    %84 = vmatpush1.msra.mxu0 0.0
    %85 = vmatprep.subr.mxu0 0.0
    %86 = vmatpush1.msra.mxu0 0.0
    %87 = vmatprep.subr.mxu0 0.0
    %88 = vmatpush1.msra.mxu0 0.0
    %89 = vmatprep.subr.mxu0 0.0
    %90 = vmatpush1.msra.mxu0 0.0
    %91 = vmatprep.subr.mxu0 0.0
    %92 = vmatpush1.msra.mxu0 0.0
    %93 = vmatprep.subr.mxu0 0.0
    %94 = vmatpush1.msra.mxu0 0.0
    %95 = vmatprep.subr.mxu0 0.0
    %96 = vmatpush1.msra.mxu0 0.0
    %97 = vmatprep.subr.mxu0 0.0
    %98 = vmatpush1.msra.mxu0 0.0
    %99 = vmatprep.subr.mxu0 0.0
    %100 = vmatpush1.msra.mxu0 0.0
    %101 = vmatprep.subr.mxu0 0.0
    %102 = vmatpush1.msra.mxu0 0.0
    %103 = vmatprep.subr.mxu0 0.0
    %104 = vmatpush1.msra.mxu0 0.0
    %105 = vmatprep.subr.mxu0 0.0
    %106 = vmatpush1.msra.mxu0 0.0
    %107 = vmatprep.subr.mxu0 0.0
    %108 = vmatpush1.msra.mxu0 0.0
    %109 = vmatprep.subr.mxu0 0.0
    %110 = vmatpush1.msra.mxu0 %v74
    %111 = vmatprep.subr.mxu0 0.0
    %112 = vmatpush1.msra.mxu0 %v73
    %113 = vmatprep.subr.mxu0 0.0
    %114 = vmatpush2.msra.mxu0 0.0
    %115 = vmatprep.subr.mxu0 0.0
    %116 = vmatpush2.msra.mxu0 0.0
    %117 = vmatprep.subr.mxu0 0.0
    %118 = vmatpush2.msra.mxu0 0.0
    %119 = vmatprep.subr.mxu0 0.0
    %120 = vmatpush2.msra.mxu0 0.0
    %121 = vmatprep.subr.mxu0 0.0
    %122 = vmatpush2.msra.mxu0 0.0
    %123 = vmatprep.subr.mxu0 0.0
    %124 = vmatpush2.msra.mxu0 0.0
    %125 = vmatprep.subr.mxu0 0.0
    %126 = vmatpush2.msra.mxu0 0.0
    %127 = vmatprep.subr.mxu0 0.0
    %128 = vmatpush2.msra.mxu0 0.0
    %129 = vmatprep.subr.mxu0 0.0
    %130 = vmatpush2.msra.mxu0 0.0
    %131 = vmatprep.subr.mxu0 0.0
    %132 = vmatpush2.msra.mxu0 0.0
    %133 = vmatprep.subr.mxu0 0.0
    %134 = vmatpush2.msra.mxu0 0.0
    %135 = vmatprep.subr.mxu0 0.0
    %136 = vmatpush2.msra.mxu0 0.0
    %137 = vmatprep.subr.mxu0 0.0
    %138 = vmatpush2.msra.mxu0 0.0
    %139 = vmatprep.subr.mxu0 0.0
    %140 = vmatpush2.msra.mxu0 0.0
    %141 = vmatprep.subr.mxu0 0.0
    %142 = vmatpush2.msra.mxu0 0.0
    %143 = vmatprep.subr.mxu0 0.0
    %144 = vmatpush2.msra.mxu0 0.0
    %145 = vmatprep.mubr.f32.mxu0 0.0
    %146 = vmatmul.mubr.f32.gmra.mxu0 %v79
    %v147 = vpop.f32.mrf.mxu0
    %v148 = vadd.f32 0.0, %v147
    %v149 = vpop.f32.mrf.mxu0
    %150 = vdwg.mxu0
    %v152 = vsel %vm77, %v76, 0
    %154 = vmatprep.subr.mxu0 0.0
    %155 = vmatpush1.msra.mxu0 0.0
    %156 = vmatprep.subr.mxu0 0.0
    %157 = vmatpush1.msra.mxu0 0.0
    %158 = vmatprep.subr.mxu0 0.0
    %159 = vmatpush1.msra.mxu0 0.0
    %160 = vmatprep.subr.mxu0 0.0
    %161 = vmatpush1.msra.mxu0 0.0
    %162 = vmatprep.subr.mxu0 0.0
    %163 = vmatpush1.msra.mxu0 0.0
    %164 = vmatprep.subr.mxu0 0.0
    %165 = vmatpush1.msra.mxu0 0.0
    %166 = vmatprep.subr.mxu0 0.0
    %167 = vmatpush1.msra.mxu0 0.0
    %168 = vmatprep.subr.mxu0 0.0
    %169 = vmatpush1.msra.mxu0 0.0
    %170 = vmatprep.subr.mxu0 0.0
    %171 = vmatpush1.msra.mxu0 0.0
    %172 = vmatprep.subr.mxu0 0.0
    %173 = vmatpush1.msra.mxu0 0.0
    %174 = vmatprep.subr.mxu0 0.0
    %175 = vmatpush1.msra.mxu0 0.0
    %176 = vmatprep.subr.mxu0 0.0
    %177 = vmatpush1.msra.mxu0 0.0
    %178 = vmatprep.subr.mxu0 0.0
    %179 = vmatpush1.msra.mxu0 0.0
    %180 = vmatprep.subr.mxu0 0.0
    %181 = vmatpush1.msra.mxu0 0.0
    %182 = vmatprep.subr.mxu0 0.0
    %183 = vmatpush1.msra.mxu0 %v74
    %184 = vmatprep.subr.mxu0 0.0
    %185 = vmatpush1.msra.mxu0 %v73
    %186 = vmatprep.subr.mxu0 0.0
    %187 = vmatpush2.msra.mxu0 0.0
    %188 = vmatprep.subr.mxu0 0.0
    %189 = vmatpush2.msra.mxu0 0.0
    %190 = vmatprep.subr.mxu0 0.0
    %191 = vmatpush2.msra.mxu0 0.0
    %192 = vmatprep.subr.mxu0 0.0
    %193 = vmatpush2.msra.mxu0 0.0
    %194 = vmatprep.subr.mxu0 0.0
    %195 = vmatpush2.msra.mxu0 0.0
    %196 = vmatprep.subr.mxu0 0.0
    %197 = vmatpush2.msra.mxu0 0.0
    %198 = vmatprep.subr.mxu0 0.0
    %199 = vmatpush2.msra.mxu0 0.0
    %200 = vmatprep.subr.mxu0 0.0
    %201 = vmatpush2.msra.mxu0 0.0
    %202 = vmatprep.subr.mxu0 0.0
    %203 = vmatpush2.msra.mxu0 0.0
    %204 = vmatprep.subr.mxu0 0.0
    %205 = vmatpush2.msra.mxu0 0.0
    %206 = vmatprep.subr.mxu0 0.0
    %207 = vmatpush2.msra.mxu0 0.0
    %208 = vmatprep.subr.mxu0 0.0
    %209 = vmatpush2.msra.mxu0 0.0
    %210 = vmatprep.subr.mxu0 0.0
    %211 = vmatpush2.msra.mxu0 0.0
    %212 = vmatprep.subr.mxu0 0.0
    %213 = vmatpush2.msra.mxu0 0.0
    %214 = vmatprep.subr.mxu0 0.0
    %215 = vmatpush2.msra.mxu0 0.0
    %216 = vmatprep.subr.mxu0 0.0
    %217 = vmatpush2.msra.mxu0 0.0
    %218 = vmatprep.mubr.f32.mxu0 0.0
    %219 = vmatmul.mubr.f32.gmra.mxu0 %v152
    %v220 = vpop.f32.mrf.mxu0
    %v221 = vadd.f32 %v148, %v220
    %v222 = vpop.f32.mrf.mxu0
    %223 = vdwg.mxu0
    %225 = vrot.lane.b32.xlu0 %v148, 64
    %v226 = vpop.permute.xlu0 %225
    %v228 = vadd.f32 %v221, %v226
    %v229 = vadd.f32 %v228, %v75
    %v230 = vxor.u32 %v229, 2147483648
    %v231 = vmul.f32 %v230, 1.442695
    %v232 = vpow.pop %v231
    %v233 = vadd.f32 %v232, 1.0
    %v234 = vrcp.pop %v233
    %v235 = vmul.f32 1.0, %v234
    %v236 = vtanh.pop %v229
    %237 = vrot.lane.b32.xlu0 %v71, 16
    %v238 = vpop.permute.xlu0 %237
    %v240 = vmul.f32 %v235, %v238
    %242 = vrot.lane.b32.xlu0 %v236, 80
    %v243 = vpop.permute.xlu0 %242
    %v245 = vmul.f32 %v235, %v243
    %247 = vrot.lane.b32.xlu0 %v245, 16
    %v248 = vpop.permute.xlu0 %247
    %v250 = vadd.f32 %v240, %v248
    %v251 = vtanh.pop %v250
    %253 = vrot.lane.b32.xlu0 %v251, 16
    %v254 = vpop.permute.xlu0 %253
    %v256 = vmul.f32 %v235, %v254
    %258 = vrot.lane.b32.xlu0 %v72, 32
    %v259 = vpop.permute.xlu0 %258
    %v261 = vadd.f32 %v256, %v259
    %263 = vrot.lane.b32.xlu0 %v261, 96
    %v264 = vpop.permute.xlu0 %263
    %266 = vst.msk [vmem:[#allocation10] sm:$0xff] %vm77, %v264
    %268 = vrot.lane.b32.xlu0 %v256, 96
    %v269 = vpop.permute.xlu0 %268
    %v270 = vsel %vm77, %v269, 0
    %272 = vmatprep.subr.mxu0 0.0
    %273 = vmatpush1.msra.mxu0 0.0
    %274 = vmatprep.subr.mxu0 0.0
    %275 = vmatpush1.msra.mxu0 0.0
    %276 = vmatprep.subr.mxu0 0.0
    %277 = vmatpush1.msra.mxu0 0.0
    %278 = vmatprep.subr.mxu0 0.0
    %279 = vmatpush1.msra.mxu0 0.0
    %280 = vmatprep.subr.mxu0 0.0
    %281 = vmatpush1.msra.mxu0 0.0
    %282 = vmatprep.subr.mxu0 0.0
    %283 = vmatpush1.msra.mxu0 0.0
    %284 = vmatprep.subr.mxu0 0.0
    %285 = vmatpush1.msra.mxu0 0.0
    %286 = vmatprep.subr.mxu0 0.0
    %287 = vmatpush1.msra.mxu0 0.0
    %288 = vmatprep.subr.mxu0 0.0
    %289 = vmatpush1.msra.mxu0 0.0
    %290 = vmatprep.subr.mxu0 0.0
    %291 = vmatpush1.msra.mxu0 0.0
    %292 = vmatprep.subr.mxu0 0.0
    %293 = vmatpush1.msra.mxu0 0.0
    %294 = vmatprep.subr.mxu0 0.0
    %295 = vmatpush1.msra.mxu0 0.0
    %296 = vmatprep.subr.mxu0 0.0
    %297 = vmatpush1.msra.mxu0 0.0
    %298 = vmatprep.subr.mxu0 0.0
    %299 = vmatpush1.msra.mxu0 0.0
    %300 = vmatprep.subr.mxu0 0.0
    %301 = vmatpush1.msra.mxu0 %v74
    %302 = vmatprep.subr.mxu0 0.0
    %303 = vmatpush1.msra.mxu0 %v73
    %304 = vmatprep.subr.mxu0 0.0
    %305 = vmatpush2.msra.mxu0 0.0
    %306 = vmatprep.subr.mxu0 0.0
    %307 = vmatpush2.msra.mxu0 0.0
    %308 = vmatprep.subr.mxu0 0.0
    %309 = vmatpush2.msra.mxu0 0.0
    %310 = vmatprep.subr.mxu0 0.0
    %311 = vmatpush2.msra.mxu0 0.0
    %312 = vmatprep.subr.mxu0 0.0
    %313 = vmatpush2.msra.mxu0 0.0
    %314 = vmatprep.subr.mxu0 0.0
    %315 = vmatpush2.msra.mxu0 0.0
    %316 = vmatprep.subr.mxu0 0.0
    %317 = vmatpush2.msra.mxu0 0.0
    %318 = vmatprep.subr.mxu0 0.0
    %319 = vmatpush2.msra.mxu0 0.0
    %320 = vmatprep.subr.mxu0 0.0
    %321 = vmatpush2.msra.mxu0 0.0
    %322 = vmatprep.subr.mxu0 0.0
    %323 = vmatpush2.msra.mxu0 0.0
    %324 = vmatprep.subr.mxu0 0.0
    %325 = vmatpush2.msra.mxu0 0.0
    %326 = vmatprep.subr.mxu0 0.0
    %327 = vmatpush2.msra.mxu0 0.0
    %328 = vmatprep.subr.mxu0 0.0
    %329 = vmatpush2.msra.mxu0 0.0
    %330 = vmatprep.subr.mxu0 0.0
    %331 = vmatpush2.msra.mxu0 0.0
    %332 = vmatprep.subr.mxu0 0.0
    %333 = vmatpush2.msra.mxu0 0.0
    %334 = vmatprep.subr.mxu0 0.0
    %335 = vmatpush2.msra.mxu0 0.0
    %336 = vmatprep.mubr.f32.mxu0 0.0
    %337 = vmatmul.mubr.f32.gmra.mxu0 %v270
    %v338 = vpop.f32.mrf.mxu0
    %v339 = vadd.f32 0.0, %v338
    %v340 = vpop.f32.mrf.mxu0
    %341 = vdwg.mxu0
    %v342 = vadd.f32 %v221, %v339
    %344 = vrot.lane.b32.xlu0 %v339, 64
    %v345 = vpop.permute.xlu0 %344
    %v347 = vadd.f32 %v342, %v345
    %v348 = vadd.f32 %v347, %v75
    %v349 = vxor.u32 %v348, 2147483648
    %v350 = vmul.f32 %v349, 1.442695
    %v351 = vpow.pop %v350
    %v352 = vadd.f32 %v351, 1.0
    %v353 = vrcp.pop %v352
    %v354 = vmul.f32 1.0, %v353
    %v355 = vtanh.pop %v348
    %v356 = vmul.f32 %v354, %v250
    %358 = vrot.lane.b32.xlu0 %v355, 80
    %v359 = vpop.permute.xlu0 %358
    %v361 = vmul.f32 %v354, %v359
    %363 = vrot.lane.b32.xlu0 %v361, 16
    %v364 = vpop.permute.xlu0 %363
    %v366 = vadd.f32 %v356, %v364
    %v367 = vtanh.pop %v366
    %369 = vrot.lane.b32.xlu0 %v367, 16
    %v370 = vpop.permute.xlu0 %369
    %v372 = vmul.f32 %v354, %v370
    %v373 = vadd.f32 %v372, %v261
    %375 = vrot.lane.b32.xlu0 %v373, 112
    %v376 = vpop.permute.xlu0 %375
    %vm378 = vcmask 261248
    %379 = vst.msk [vmem:[#allocation10] sm:$0xff] %vm378, %v376
    %381 = vrot.lane.b32.xlu0 %v372, 96
    %v382 = vpop.permute.xlu0 %381
    %v383 = vsel %vm77, %v382, 0
    %385 = vmatprep.subr.mxu0 0.0
    %386 = vmatpush1.msra.mxu0 0.0
    %387 = vmatprep.subr.mxu0 0.0
    %388 = vmatpush1.msra.mxu0 0.0
    %389 = vmatprep.subr.mxu0 0.0
    %390 = vmatpush1.msra.mxu0 0.0
    %391 = vmatprep.subr.mxu0 0.0
    %392 = vmatpush1.msra.mxu0 0.0
    %393 = vmatprep.subr.mxu0 0.0
    %394 = vmatpush1.msra.mxu0 0.0
    %395 = vmatprep.subr.mxu0 0.0
    %396 = vmatpush1.msra.mxu0 0.0
    %397 = vmatprep.subr.mxu0 0.0
    %398 = vmatpush1.msra.mxu0 0.0
    %399 = vmatprep.subr.mxu0 0.0
    %400 = vmatpush1.msra.mxu0 0.0
    %401 = vmatprep.subr.mxu0 0.0
    %402 = vmatpush1.msra.mxu0 0.0
    %403 = vmatprep.subr.mxu0 0.0
    %404 = vmatpush1.msra.mxu0 0.0
    %405 = vmatprep.subr.mxu0 0.0
    %406 = vmatpush1.msra.mxu0 0.0
    %407 = vmatprep.subr.mxu0 0.0
    %408 = vmatpush1.msra.mxu0 0.0
    %409 = vmatprep.subr.mxu0 0.0
    %410 = vmatpush1.msra.mxu0 0.0
    %411 = vmatprep.subr.mxu0 0.0
    %412 = vmatpush1.msra.mxu0 0.0
    %413 = vmatprep.subr.mxu0 0.0
    %414 = vmatpush1.msra.mxu0 %v74
    %415 = vmatprep.subr.mxu0 0.0
    %416 = vmatpush1.msra.mxu0 %v73
    %417 = vmatprep.subr.mxu0 0.0
    %418 = vmatpush2.msra.mxu0 0.0
    %419 = vmatprep.subr.mxu0 0.0
    %420 = vmatpush2.msra.mxu0 0.0
    %421 = vmatprep.subr.mxu0 0.0
    %422 = vmatpush2.msra.mxu0 0.0
    %423 = vmatprep.subr.mxu0 0.0
    %424 = vmatpush2.msra.mxu0 0.0
    %425 = vmatprep.subr.mxu0 0.0
    %426 = vmatpush2.msra.mxu0 0.0
    %427 = vmatprep.subr.mxu0 0.0
    %428 = vmatpush2.msra.mxu0 0.0
    %429 = vmatprep.subr.mxu0 0.0
    %430 = vmatpush2.msra.mxu0 0.0
    %431 = vmatprep.subr.mxu0 0.0
    %432 = vmatpush2.msra.mxu0 0.0
    %433 = vmatprep.subr.mxu0 0.0
    %434 = vmatpush2.msra.mxu0 0.0
    %435 = vmatprep.subr.mxu0 0.0
    %436 = vmatpush2.msra.mxu0 0.0
    %437 = vmatprep.subr.mxu0 0.0
    %438 = vmatpush2.msra.mxu0 0.0
    %439 = vmatprep.subr.mxu0 0.0
    %440 = vmatpush2.msra.mxu0 0.0
    %441 = vmatprep.subr.mxu0 0.0
    %442 = vmatpush2.msra.mxu0 0.0
    %443 = vmatprep.subr.mxu0 0.0
    %444 = vmatpush2.msra.mxu0 0.0
    %445 = vmatprep.subr.mxu0 0.0
    %446 = vmatpush2.msra.mxu0 0.0
    %447 = vmatprep.subr.mxu0 0.0
    %448 = vmatpush2.msra.mxu0 0.0
    %449 = vmatprep.mubr.f32.mxu0 0.0
    %450 = vmatmul.mubr.f32.gmra.mxu0 %v383
    %v451 = vpop.f32.mrf.mxu0
    %v452 = vadd.f32 0.0, %v451
    %v453 = vpop.f32.mrf.mxu0
    %454 = vdwg.mxu0
    %v455 = vadd.f32 %v342, %v452
    %457 = vrot.lane.b32.xlu0 %v452, 64
    %v458 = vpop.permute.xlu0 %457
    %v460 = vadd.f32 %v455, %v458
    %v461 = vadd.f32 %v460, %v75
    %v462 = vxor.u32 %v461, 2147483648
    %v463 = vmul.f32 %v462, 1.442695
    %v464 = vpow.pop %v463
    %v465 = vadd.f32 %v464, 1.0
    %v466 = vrcp.pop %v465
    %v467 = vmul.f32 1.0, %v466
    %v468 = vtanh.pop %v461
    %v469 = vmul.f32 %v467, %v366
    %471 = vrot.lane.b32.xlu0 %v468, 80
    %v472 = vpop.permute.xlu0 %471
    %v474 = vmul.f32 %v467, %v472
    %476 = vrot.lane.b32.xlu0 %v474, 16
    %v477 = vpop.permute.xlu0 %476
    %v479 = vadd.f32 %v469, %v477
    %v480 = vtanh.pop %v479
    %482 = vrot.lane.b32.xlu0 %v480, 16
    %v483 = vpop.permute.xlu0 %482
    %v485 = vmul.f32 %v467, %v483
    %v486 = vadd.f32 %v485, %v373
    %vm487 = vcmask 392448
    %488 = vst.msk [vmem:[#allocation10] sm:$0xff] %vm487, %v486
    %490 = vrot.lane.b32.xlu0 %v485, 96
    %v491 = vpop.permute.xlu0 %490
    %v492 = vsel %vm77, %v491, 0
    %494 = vmatprep.subr.mxu0 0.0
    %495 = vmatpush1.msra.mxu0 0.0
    %496 = vmatprep.subr.mxu0 0.0
    %497 = vmatpush1.msra.mxu0 0.0
    %498 = vmatprep.subr.mxu0 0.0
    %499 = vmatpush1.msra.mxu0 0.0
    %500 = vmatprep.subr.mxu0 0.0
    %501 = vmatpush1.msra.mxu0 0.0
    %502 = vmatprep.subr.mxu0 0.0
    %503 = vmatpush1.msra.mxu0 0.0
    %504 = vmatprep.subr.mxu0 0.0
    %505 = vmatpush1.msra.mxu0 0.0
    %506 = vmatprep.subr.mxu0 0.0
    %507 = vmatpush1.msra.mxu0 0.0
    %508 = vmatprep.subr.mxu0 0.0
    %509 = vmatpush1.msra.mxu0 0.0
    %510 = vmatprep.subr.mxu0 0.0
    %511 = vmatpush1.msra.mxu0 0.0
    %512 = vmatprep.subr.mxu0 0.0
    %513 = vmatpush1.msra.mxu0 0.0
    %514 = vmatprep.subr.mxu0 0.0
    %515 = vmatpush1.msra.mxu0 0.0
    %516 = vmatprep.subr.mxu0 0.0
    %517 = vmatpush1.msra.mxu0 0.0
    %518 = vmatprep.subr.mxu0 0.0
    %519 = vmatpush1.msra.mxu0 0.0
    %520 = vmatprep.subr.mxu0 0.0
    %521 = vmatpush1.msra.mxu0 0.0
    %522 = vmatprep.subr.mxu0 0.0
    %523 = vmatpush1.msra.mxu0 %v74
    %524 = vmatprep.subr.mxu0 0.0
    %525 = vmatpush1.msra.mxu0 %v73
    %526 = vmatprep.subr.mxu0 0.0
    %527 = vmatpush2.msra.mxu0 0.0
    %528 = vmatprep.subr.mxu0 0.0
    %529 = vmatpush2.msra.mxu0 0.0
    %530 = vmatprep.subr.mxu0 0.0
    %531 = vmatpush2.msra.mxu0 0.0
    %532 = vmatprep.subr.mxu0 0.0
    %533 = vmatpush2.msra.mxu0 0.0
    %534 = vmatprep.subr.mxu0 0.0
    %535 = vmatpush2.msra.mxu0 0.0
    %536 = vmatprep.subr.mxu0 0.0
    %537 = vmatpush2.msra.mxu0 0.0
    %538 = vmatprep.subr.mxu0 0.0
    %539 = vmatpush2.msra.mxu0 0.0
    %540 = vmatprep.subr.mxu0 0.0
    %541 = vmatpush2.msra.mxu0 0.0
    %542 = vmatprep.subr.mxu0 0.0
    %543 = vmatpush2.msra.mxu0 0.0
    %544 = vmatprep.subr.mxu0 0.0
    %545 = vmatpush2.msra.mxu0 0.0
    %546 = vmatprep.subr.mxu0 0.0
    %547 = vmatpush2.msra.mxu0 0.0
    %548 = vmatprep.subr.mxu0 0.0
    %549 = vmatpush2.msra.mxu0 0.0
    %550 = vmatprep.subr.mxu0 0.0
    %551 = vmatpush2.msra.mxu0 0.0
    %552 = vmatprep.subr.mxu0 0.0
    %553 = vmatpush2.msra.mxu0 0.0
    %554 = vmatprep.subr.mxu0 0.0
    %555 = vmatpush2.msra.mxu0 0.0
    %556 = vmatprep.subr.mxu0 0.0
    %557 = vmatpush2.msra.mxu0 0.0
    %558 = vmatprep.mubr.f32.mxu0 0.0
    %559 = vmatmul.mubr.f32.gmra.mxu0 %v492
    %v560 = vpop.f32.mrf.mxu0
    %v561 = vadd.f32 0.0, %v560
    %v562 = vpop.f32.mrf.mxu0
    %563 = vdwg.mxu0
    %v564 = vadd.f32 %v455, %v561
    %566 = vrot.lane.b32.xlu0 %v561, 64
    %v567 = vpop.permute.xlu0 %566
    %v569 = vadd.f32 %v564, %v567
    %v570 = vadd.f32 %v569, %v75
    %v571 = vxor.u32 %v570, 2147483648
    %v572 = vmul.f32 %v571, 1.442695
    %v573 = vpow.pop %v572
    %v574 = vadd.f32 %v573, 1.0
    %v575 = vrcp.pop %v574
    %v576 = vmul.f32 1.0, %v575
    %v577 = vtanh.pop %v570
    %v578 = vmul.f32 %v576, %v479
    %580 = vrot.lane.b32.xlu0 %v577, 80
    %v581 = vpop.permute.xlu0 %580
    %v583 = vmul.f32 %v576, %v581
    %585 = vrot.lane.b32.xlu0 %v583, 16
    %v586 = vpop.permute.xlu0 %585
    %v588 = vadd.f32 %v578, %v586
    %v589 = vtanh.pop %v588
    %591 = vrot.lane.b32.xlu0 %v589, 16
    %v592 = vpop.permute.xlu0 %591
    %v594 = vmul.f32 %v576, %v592
    %v595 = vadd.f32 %v594, %v486
    %597 = vrot.lane.b32.xlu0 %v595, 16
    %v598 = vpop.permute.xlu0 %597
    %vm600 = vcmask 523648
    %601 = vst.msk [vmem:[#allocation10] sm:$0xff] %vm600, %v598
    %603 = vrot.lane.b32.xlu0 %v594, 96
    %v604 = vpop.permute.xlu0 %603
    %v605 = vsel %vm77, %v604, 0
    %607 = vmatprep.subr.mxu0 0.0
    %608 = vmatpush1.msra.mxu0 0.0
    %609 = vmatprep.subr.mxu0 0.0
    %610 = vmatpush1.msra.mxu0 0.0
    %611 = vmatprep.subr.mxu0 0.0
    %612 = vmatpush1.msra.mxu0 0.0
    %613 = vmatprep.subr.mxu0 0.0
    %614 = vmatpush1.msra.mxu0 0.0
    %615 = vmatprep.subr.mxu0 0.0
    %616 = vmatpush1.msra.mxu0 0.0
    %617 = vmatprep.subr.mxu0 0.0
    %618 = vmatpush1.msra.mxu0 0.0
    %619 = vmatprep.subr.mxu0 0.0
    %620 = vmatpush1.msra.mxu0 0.0
    %621 = vmatprep.subr.mxu0 0.0
    %622 = vmatpush1.msra.mxu0 0.0
    %623 = vmatprep.subr.mxu0 0.0
    %624 = vmatpush1.msra.mxu0 0.0
    %625 = vmatprep.subr.mxu0 0.0
    %626 = vmatpush1.msra.mxu0 0.0
    %627 = vmatprep.subr.mxu0 0.0
    %628 = vmatpush1.msra.mxu0 0.0
    %629 = vmatprep.subr.mxu0 0.0
    %630 = vmatpush1.msra.mxu0 0.0
    %631 = vmatprep.subr.mxu0 0.0
    %632 = vmatpush1.msra.mxu0 0.0
    %633 = vmatprep.subr.mxu0 0.0
    %634 = vmatpush1.msra.mxu0 0.0
    %635 = vmatprep.subr.mxu0 0.0
    %636 = vmatpush1.msra.mxu0 %v74
    %637 = vmatprep.subr.mxu0 0.0
    %638 = vmatpush1.msra.mxu0 %v73
    %639 = vmatprep.subr.mxu0 0.0
    %640 = vmatpush2.msra.mxu0 0.0
    %641 = vmatprep.subr.mxu0 0.0
    %642 = vmatpush2.msra.mxu0 0.0
    %643 = vmatprep.subr.mxu0 0.0
    %644 = vmatpush2.msra.mxu0 0.0
    %645 = vmatprep.subr.mxu0 0.0
    %646 = vmatpush2.msra.mxu0 0.0
    %647 = vmatprep.subr.mxu0 0.0
    %648 = vmatpush2.msra.mxu0 0.0
    %649 = vmatprep.subr.mxu0 0.0
    %650 = vmatpush2.msra.mxu0 0.0
    %651 = vmatprep.subr.mxu0 0.0
    %652 = vmatpush2.msra.mxu0 0.0
    %653 = vmatprep.subr.mxu0 0.0
    %654 = vmatpush2.msra.mxu0 0.0
    %655 = vmatprep.subr.mxu0 0.0
    %656 = vmatpush2.msra.mxu0 0.0
    %657 = vmatprep.subr.mxu0 0.0
    %658 = vmatpush2.msra.mxu0 0.0
    %659 = vmatprep.subr.mxu0 0.0
    %660 = vmatpush2.msra.mxu0 0.0
    %661 = vmatprep.subr.mxu0 0.0
    %662 = vmatpush2.msra.mxu0 0.0
    %663 = vmatprep.subr.mxu0 0.0
    %664 = vmatpush2.msra.mxu0 0.0
    %665 = vmatprep.subr.mxu0 0.0
    %666 = vmatpush2.msra.mxu0 0.0
    %667 = vmatprep.subr.mxu0 0.0
    %668 = vmatpush2.msra.mxu0 0.0
    %669 = vmatprep.subr.mxu0 0.0
    %670 = vmatpush2.msra.mxu0 0.0
    %671 = vmatprep.mubr.f32.mxu0 0.0
    %672 = vmatmul.mubr.f32.gmra.mxu0 %v605
    %v673 = vpop.f32.mrf.mxu0
    %v674 = vadd.f32 0.0, %v673
    %v675 = vpop.f32.mrf.mxu0
    %676 = vdwg.mxu0
    %v677 = vadd.f32 %v564, %v674
    %679 = vrot.lane.b32.xlu0 %v674, 64
    %v680 = vpop.permute.xlu0 %679
    %v682 = vadd.f32 %v677, %v680
    %v683 = vadd.f32 %v682, %v75
    %v684 = vxor.u32 %v683, 2147483648
    %v685 = vmul.f32 %v684, 1.442695
    %v686 = vpow.pop %v685
    %v687 = vadd.f32 %v686, 1.0
    %v688 = vrcp.pop %v687
    %v689 = vmul.f32 1.0, %v688
    %v690 = vtanh.pop %v683
    %v691 = vmul.f32 %v689, %v588
    %693 = vrot.lane.b32.xlu0 %v690, 80
    %v694 = vpop.permute.xlu0 %693
    %v696 = vmul.f32 %v689, %v694
    %698 = vrot.lane.b32.xlu0 %v696, 16
    %v699 = vpop.permute.xlu0 %698
    %v701 = vadd.f32 %v691, %v699
    %v702 = vtanh.pop %v701
    %704 = vrot.lane.b32.xlu0 %v702, 16
    %v705 = vpop.permute.xlu0 %704
    %v707 = vmul.f32 %v689, %v705
    %v708 = vadd.f32 %v707, %v595
    %710 = vrot.lane.b32.xlu0 %v708, 32
    %v711 = vpop.permute.xlu0 %710
    %vm713 = vcmask 654848
    %714 = vst.msk [vmem:[#allocation10] sm:$0xff] %vm713, %v711
    %716 = vrot.lane.b32.xlu0 %v707, 96
    %v717 = vpop.permute.xlu0 %716
    %v718 = vsel %vm77, %v717, 0
    %720 = vmatprep.subr.mxu0 0.0
    %721 = vmatpush1.msra.mxu0 0.0
    %722 = vmatprep.subr.mxu0 0.0
    %723 = vmatpush1.msra.mxu0 0.0
    %724 = vmatprep.subr.mxu0 0.0
    %725 = vmatpush1.msra.mxu0 0.0
    %726 = vmatprep.subr.mxu0 0.0
    %727 = vmatpush1.msra.mxu0 0.0
    %728 = vmatprep.subr.mxu0 0.0
    %729 = vmatpush1.msra.mxu0 0.0
    %730 = vmatprep.subr.mxu0 0.0
    %731 = vmatpush1.msra.mxu0 0.0
    %732 = vmatprep.subr.mxu0 0.0
    %733 = vmatpush1.msra.mxu0 0.0
    %734 = vmatprep.subr.mxu0 0.0
    %735 = vmatpush1.msra.mxu0 0.0
    %736 = vmatprep.subr.mxu0 0.0
    %737 = vmatpush1.msra.mxu0 0.0
    %738 = vmatprep.subr.mxu0 0.0
    %739 = vmatpush1.msra.mxu0 0.0
    %740 = vmatprep.subr.mxu0 0.0
    %741 = vmatpush1.msra.mxu0 0.0
    %742 = vmatprep.subr.mxu0 0.0
    %743 = vmatpush1.msra.mxu0 0.0
    %744 = vmatprep.subr.mxu0 0.0
    %745 = vmatpush1.msra.mxu0 0.0
    %746 = vmatprep.subr.mxu0 0.0
    %747 = vmatpush1.msra.mxu0 0.0
    %748 = vmatprep.subr.mxu0 0.0
    %749 = vmatpush1.msra.mxu0 %v74
    %750 = vmatprep.subr.mxu0 0.0
    %751 = vmatpush1.msra.mxu0 %v73
    %752 = vmatprep.subr.mxu0 0.0
    %753 = vmatpush2.msra.mxu0 0.0
    %754 = vmatprep.subr.mxu0 0.0
    %755 = vmatpush2.msra.mxu0 0.0
    %756 = vmatprep.subr.mxu0 0.0
    %757 = vmatpush2.msra.mxu0 0.0
    %758 = vmatprep.subr.mxu0 0.0
    %759 = vmatpush2.msra.mxu0 0.0
    %760 = vmatprep.subr.mxu0 0.0
    %761 = vmatpush2.msra.mxu0 0.0
    %762 = vmatprep.subr.mxu0 0.0
    %763 = vmatpush2.msra.mxu0 0.0
    %764 = vmatprep.subr.mxu0 0.0
    %765 = vmatpush2.msra.mxu0 0.0
    %766 = vmatprep.subr.mxu0 0.0
    %767 = vmatpush2.msra.mxu0 0.0
    %768 = vmatprep.subr.mxu0 0.0
    %769 = vmatpush2.msra.mxu0 0.0
    %770 = vmatprep.subr.mxu0 0.0
    %771 = vmatpush2.msra.mxu0 0.0
    %772 = vmatprep.subr.mxu0 0.0
    %773 = vmatpush2.msra.mxu0 0.0
    %774 = vmatprep.subr.mxu0 0.0
    %775 = vmatpush2.msra.mxu0 0.0
    %776 = vmatprep.subr.mxu0 0.0
    %777 = vmatpush2.msra.mxu0 0.0
    %778 = vmatprep.subr.mxu0 0.0
    %779 = vmatpush2.msra.mxu0 0.0
    %780 = vmatprep.subr.mxu0 0.0
    %781 = vmatpush2.msra.mxu0 0.0
    %782 = vmatprep.subr.mxu0 0.0
    %783 = vmatpush2.msra.mxu0 0.0
    %784 = vmatprep.mubr.f32.mxu0 0.0
    %785 = vmatmul.mubr.f32.gmra.mxu0 %v718
    %v786 = vpop.f32.mrf.mxu0
    %v787 = vadd.f32 0.0, %v786
    %v788 = vpop.f32.mrf.mxu0
    %789 = vdwg.mxu0
    %v790 = vadd.f32 %v677, %v787
    %792 = vrot.lane.b32.xlu0 %v787, 64
    %v793 = vpop.permute.xlu0 %792
    %v795 = vadd.f32 %v790, %v793
    %v796 = vadd.f32 %v795, %v75
    %v797 = vxor.u32 %v796, 2147483648
    %v798 = vmul.f32 %v797, 1.442695
    %v799 = vpow.pop %v798
    %v800 = vadd.f32 %v799, 1.0
    %v801 = vrcp.pop %v800
    %v802 = vmul.f32 1.0, %v801
    %v803 = vtanh.pop %v796
    %v804 = vmul.f32 %v802, %v701
    %806 = vrot.lane.b32.xlu0 %v803, 80
    %v807 = vpop.permute.xlu0 %806
    %v809 = vmul.f32 %v802, %v807
    %811 = vrot.lane.b32.xlu0 %v809, 16
    %v812 = vpop.permute.xlu0 %811
    %v814 = vadd.f32 %v804, %v812
    %v815 = vtanh.pop %v814
    %817 = vrot.lane.b32.xlu0 %v815, 16
    %v818 = vpop.permute.xlu0 %817
    %v820 = vmul.f32 %v802, %v818
    %v821 = vadd.f32 %v820, %v708
    %823 = vrot.lane.b32.xlu0 %v821, 48
    %v824 = vpop.permute.xlu0 %823
    %vm826 = vcmask 786048
    %827 = vst.msk [vmem:[#allocation10] sm:$0xff] %vm826, %v824
    %829 = vrot.lane.b32.xlu0 %v820, 96
    %v830 = vpop.permute.xlu0 %829
    %v831 = vsel %vm77, %v830, 0
    %833 = vmatprep.subr.mxu0 0.0
    %834 = vmatpush1.msra.mxu0 0.0
    %835 = vmatprep.subr.mxu0 0.0
    %836 = vmatpush1.msra.mxu0 0.0
    %837 = vmatprep.subr.mxu0 0.0
    %838 = vmatpush1.msra.mxu0 0.0
    %839 = vmatprep.subr.mxu0 0.0
    %840 = vmatpush1.msra.mxu0 0.0
    %841 = vmatprep.subr.mxu0 0.0
    %842 = vmatpush1.msra.mxu0 0.0
    %843 = vmatprep.subr.mxu0 0.0
    %844 = vmatpush1.msra.mxu0 0.0
    %845 = vmatprep.subr.mxu0 0.0
    %846 = vmatpush1.msra.mxu0 0.0
    %847 = vmatprep.subr.mxu0 0.0
    %848 = vmatpush1.msra.mxu0 0.0
    %849 = vmatprep.subr.mxu0 0.0
    %850 = vmatpush1.msra.mxu0 0.0
    %851 = vmatprep.subr.mxu0 0.0
    %852 = vmatpush1.msra.mxu0 0.0
    %853 = vmatprep.subr.mxu0 0.0
    %854 = vmatpush1.msra.mxu0 0.0
    %855 = vmatprep.subr.mxu0 0.0
    %856 = vmatpush1.msra.mxu0 0.0
    %857 = vmatprep.subr.mxu0 0.0
    %858 = vmatpush1.msra.mxu0 0.0
    %859 = vmatprep.subr.mxu0 0.0
    %860 = vmatpush1.msra.mxu0 0.0
    %861 = vmatprep.subr.mxu0 0.0
    %862 = vmatpush1.msra.mxu0 %v74
    %863 = vmatprep.subr.mxu0 0.0
    %864 = vmatpush1.msra.mxu0 %v73
    %865 = vmatprep.subr.mxu0 0.0
    %866 = vmatpush2.msra.mxu0 0.0
    %867 = vmatprep.subr.mxu0 0.0
    %868 = vmatpush2.msra.mxu0 0.0
    %869 = vmatprep.subr.mxu0 0.0
    %870 = vmatpush2.msra.mxu0 0.0
    %871 = vmatprep.subr.mxu0 0.0
    %872 = vmatpush2.msra.mxu0 0.0
    %873 = vmatprep.subr.mxu0 0.0
    %874 = vmatpush2.msra.mxu0 0.0
    %875 = vmatprep.subr.mxu0 0.0
    %876 = vmatpush2.msra.mxu0 0.0
    %877 = vmatprep.subr.mxu0 0.0
    %878 = vmatpush2.msra.mxu0 0.0
    %879 = vmatprep.subr.mxu0 0.0
    %880 = vmatpush2.msra.mxu0 0.0
    %881 = vmatprep.subr.mxu0 0.0
    %882 = vmatpush2.msra.mxu0 0.0
    %883 = vmatprep.subr.mxu0 0.0
    %884 = vmatpush2.msra.mxu0 0.0
    %885 = vmatprep.subr.mxu0 0.0
    %886 = vmatpush2.msra.mxu0 0.0
    %887 = vmatprep.subr.mxu0 0.0
    %888 = vmatpush2.msra.mxu0 0.0
    %889 = vmatprep.subr.mxu0 0.0
    %890 = vmatpush2.msra.mxu0 0.0
    %891 = vmatprep.subr.mxu0 0.0
    %892 = vmatpush2.msra.mxu0 0.0
    %893 = vmatprep.subr.mxu0 0.0
    %894 = vmatpush2.msra.mxu0 0.0
    %895 = vmatprep.subr.mxu0 0.0
    %896 = vmatpush2.msra.mxu0 0.0
    %897 = vmatprep.mubr.f32.mxu0 0.0
    %898 = vmatmul.mubr.f32.gmra.mxu0 %v831
    %v899 = vpop.f32.mrf.mxu0
    %v900 = vadd.f32 0.0, %v899
    %v901 = vpop.f32.mrf.mxu0
    %902 = vdwg.mxu0
    %v903 = vadd.f32 %v790, %v900
    %905 = vrot.lane.b32.xlu0 %v900, 64
    %v906 = vpop.permute.xlu0 %905
    %v908 = vadd.f32 %v903, %v906
    %v909 = vadd.f32 %v908, %v75
    %v910 = vxor.u32 %v909, 2147483648
    %v911 = vmul.f32 %v910, 1.442695
    %v912 = vpow.pop %v911
    %v913 = vadd.f32 %v912, 1.0
    %v914 = vrcp.pop %v913
    %v915 = vmul.f32 1.0, %v914
    %v916 = vtanh.pop %v909
    %v917 = vmul.f32 %v915, %v814
    %919 = vrot.lane.b32.xlu0 %v916, 80
    %v920 = vpop.permute.xlu0 %919
    %v922 = vmul.f32 %v915, %v920
    %924 = vrot.lane.b32.xlu0 %v922, 16
    %v925 = vpop.permute.xlu0 %924
    %v927 = vadd.f32 %v917, %v925
    %v928 = vtanh.pop %v927
    %930 = vrot.lane.b32.xlu0 %v928, 16
    %v931 = vpop.permute.xlu0 %930
    %v933 = vmul.f32 %v915, %v931
    %v934 = vadd.f32 %v933, %v821
    %936 = vrot.lane.b32.xlu0 %v934, 64
    %v937 = vpop.permute.xlu0 %936
    %vm939 = vcmask 917248
    %940 = vst.msk [vmem:[#allocation10] sm:$0xff] %vm939, %v937
    %942 = vrot.lane.b32.xlu0 %v933, 96
    %v943 = vpop.permute.xlu0 %942
    %v944 = vsel %vm77, %v943, 0
    %946 = vmatprep.subr.mxu0 0.0
    %947 = vmatpush1.msra.mxu0 0.0
    %948 = vmatprep.subr.mxu0 0.0
    %949 = vmatpush1.msra.mxu0 0.0
    %950 = vmatprep.subr.mxu0 0.0
    %951 = vmatpush1.msra.mxu0 0.0
    %952 = vmatprep.subr.mxu0 0.0
    %953 = vmatpush1.msra.mxu0 0.0
    %954 = vmatprep.subr.mxu0 0.0
    %955 = vmatpush1.msra.mxu0 0.0
    %956 = vmatprep.subr.mxu0 0.0
    %957 = vmatpush1.msra.mxu0 0.0
    %958 = vmatprep.subr.mxu0 0.0
    %959 = vmatpush1.msra.mxu0 0.0
    %960 = vmatprep.subr.mxu0 0.0
    %961 = vmatpush1.msra.mxu0 0.0
    %962 = vmatprep.subr.mxu0 0.0
    %963 = vmatpush1.msra.mxu0 0.0
    %964 = vmatprep.subr.mxu0 0.0
    %965 = vmatpush1.msra.mxu0 0.0
    %966 = vmatprep.subr.mxu0 0.0
    %967 = vmatpush1.msra.mxu0 0.0
    %968 = vmatprep.subr.mxu0 0.0
    %969 = vmatpush1.msra.mxu0 0.0
    %970 = vmatprep.subr.mxu0 0.0
    %971 = vmatpush1.msra.mxu0 0.0
    %972 = vmatprep.subr.mxu0 0.0
    %973 = vmatpush1.msra.mxu0 0.0
    %974 = vmatprep.subr.mxu0 0.0
    %975 = vmatpush1.msra.mxu0 %v74
    %976 = vmatprep.subr.mxu0 0.0
    %977 = vmatpush1.msra.mxu0 %v73
    %978 = vmatprep.subr.mxu0 0.0
    %979 = vmatpush2.msra.mxu0 0.0
    %980 = vmatprep.subr.mxu0 0.0
    %981 = vmatpush2.msra.mxu0 0.0
    %982 = vmatprep.subr.mxu0 0.0
    %983 = vmatpush2.msra.mxu0 0.0
    %984 = vmatprep.subr.mxu0 0.0
    %985 = vmatpush2.msra.mxu0 0.0
    %986 = vmatprep.subr.mxu0 0.0
    %987 = vmatpush2.msra.mxu0 0.0
    %988 = vmatprep.subr.mxu0 0.0
    %989 = vmatpush2.msra.mxu0 0.0
    %990 = vmatprep.subr.mxu0 0.0
    %991 = vmatpush2.msra.mxu0 0.0
    %992 = vmatprep.subr.mxu0 0.0
    %993 = vmatpush2.msra.mxu0 0.0
    %994 = vmatprep.subr.mxu0 0.0
    %995 = vmatpush2.msra.mxu0 0.0
    %996 = vmatprep.subr.mxu0 0.0
    %997 = vmatpush2.msra.mxu0 0.0
    %998 = vmatprep.subr.mxu0 0.0
    %999 = vmatpush2.msra.mxu0 0.0
    %1000 = vmatprep.subr.mxu0 0.0
    %1001 = vmatpush2.msra.mxu0 0.0
    %1002 = vmatprep.subr.mxu0 0.0
    %1003 = vmatpush2.msra.mxu0 0.0
    %1004 = vmatprep.subr.mxu0 0.0
    %1005 = vmatpush2.msra.mxu0 0.0
    %1006 = vmatprep.subr.mxu0 0.0
    %1007 = vmatpush2.msra.mxu0 0.0
    %1008 = vmatprep.subr.mxu0 0.0
    %1009 = vmatpush2.msra.mxu0 0.0
    %1010 = vmatprep.mubr.f32.mxu0 0.0
    %1011 = vmatmul.mubr.f32.gmra.mxu0 %v944
    %v1012 = vpop.f32.mrf.mxu0
    %v1013 = vadd.f32 0.0, %v1012
    %v1014 = vpop.f32.mrf.mxu0
    %1015 = vdwg.mxu0
    %v1016 = vadd.f32 %v903, %v1013
    %1018 = vrot.lane.b32.xlu0 %v1013, 64
    %v1019 = vpop.permute.xlu0 %1018
    %v1021 = vadd.f32 %v1016, %v1019
    %v1022 = vadd.f32 %v1021, %v75
    %v1023 = vxor.u32 %v1022, 2147483648
    %v1024 = vmul.f32 %v1023, 1.442695
    %v1025 = vpow.pop %v1024
    %v1026 = vadd.f32 %v1025, 1.0
    %v1027 = vrcp.pop %v1026
    %v1028 = vmul.f32 1.0, %v1027
    %v1029 = vtanh.pop %v1022
    %v1030 = vmul.f32 %v1028, %v927
    %1032 = vrot.lane.b32.xlu0 %v1029, 80
    %v1033 = vpop.permute.xlu0 %1032
    %v1035 = vmul.f32 %v1028, %v1033
    %1037 = vrot.lane.b32.xlu0 %v1035, 16
    %v1038 = vpop.permute.xlu0 %1037
    %v1040 = vadd.f32 %v1030, %v1038
    %v1041 = vtanh.pop %v1040
    %1043 = vrot.lane.b32.xlu0 %v1041, 16
    %v1044 = vpop.permute.xlu0 %1043
    %v1046 = vmul.f32 %v1028, %v1044
    %v1047 = vadd.f32 %v1046, %v934
    %1049 = vrot.lane.b32.xlu0 %v1047, 80
    %v1050 = vpop.permute.xlu0 %1049
    %vm1052 = vcmask 1048448
    %1053 = vst.msk [vmem:[#allocation10] sm:$0xff] %vm1052, %v1050
    %1055 = vrot.lane.b32.xlu0 %v1046, 96
    %v1056 = vpop.permute.xlu0 %1055
    %1058 = vst.msk [vmem:[#allocation11] sm:$0xff] %vm77, %v1056
    %1060 = vrot.lane.b32.xlu0 %v1040, 112
    %v1061 = vpop.permute.xlu0 %1060
    %1063 = vst.msk [vmem:[#allocation13] sm:$0xff] %vm77, %v1061
    // Predicated region
    $region34: #{tpu_custom_call.1} parent=1 // pred_check
      _
    $region35: #{tpu_custom_call.1} parent=1 // pred_check_branch
      %1065 = sbr.rel (0) target = $region37
    $region36: #{tpu_custom_call.1} parent=1 // pred_region
      %s1067 = ssub.s32 128, 128
      %1068 = vsyncadd [#allocation4], %s1067
      %s1070 = sshll.u32 [#allocation10], 4
      %s1071 = int_to_ptr.vmem [resolvable:$true] %s1070
      %1073 = dma.vmem_to_hbm [thread:$0]  %s1071, 128, %s4, [#allocation4]
    $region37: #{tpu_custom_call.1} parent=1 // pred_fallthru
      _
    // Predicated region
    $region38: #{tpu_custom_call.1} parent=1 // pred_check
      _
    $region39: #{tpu_custom_call.1} parent=1 // pred_check_branch
      %1075 = sbr.rel (0) target = $region41
    $region40: #{tpu_custom_call.1} parent=1 // pred_region
      %s1077 = ssub.s32 128, 128
      %1078 = vsyncadd [#allocation12], %s1077
      %s1080 = sshll.u32 [#allocation11], 4
      %s1081 = int_to_ptr.vmem [resolvable:$true] %s1080
      %1083 = dma.vmem_to_hbm [thread:$0]  %s1081, 128, %s5, [#allocation12]
    $region41: #{tpu_custom_call.1} parent=1 // pred_fallthru
      _
    // Predicated region
    $region42: #{tpu_custom_call.1} parent=1 // pred_check
      _
    $region43: #{tpu_custom_call.1} parent=1 // pred_check_branch
      %1085 = sbr.rel (0) target = $region45
    $region44: #{tpu_custom_call.1} parent=1 // pred_region
      %s1087 = ssub.s32 128, 128
      %1088 = vsyncadd [#allocation12], %s1087
      %s1090 = sshll.u32 [#allocation13], 4
      %s1091 = int_to_ptr.vmem [resolvable:$true] %s1090
      %1093 = dma.vmem_to_hbm [thread:$0]  %s1091, 128, %s6, [#allocation12]
    $region45: #{tpu_custom_call.1} parent=1 // pred_fallthru
      _
    // Predicated region
    $region46: #{tpu_custom_call.1} parent=1 // pred_check
      _
    $region47: #{tpu_custom_call.1} parent=1 // pred_check_branch
      %1095 = sbr.rel (0) target = $region49
    $region48: #{tpu_custom_call.1} parent=1 // pred_region
      %1096 = dma.done [#allocation4], 128
    $region49: #{tpu_custom_call.1} parent=1 // pred_fallthru
      _
    // Predicated region
    $region50: #{tpu_custom_call.1} parent=1 // pred_check
      _
    $region51: #{tpu_custom_call.1} parent=1 // pred_check_branch
      %1098 = sbr.rel (0) target = $region53
    $region52: #{tpu_custom_call.1} parent=1 // pred_region
      %1099 = dma.done [#allocation12], 128
    $region53: #{tpu_custom_call.1} parent=1 // pred_fallthru
      _
    // Predicated region
    $region54: #{tpu_custom_call.1} parent=1 // pred_check
      _
    $region55: #{tpu_custom_call.1} parent=1 // pred_check_branch
      %1101 = sbr.rel (0) target = $region57
    $region56: #{tpu_custom_call.1} parent=1 // pred_region
      %1102 = dma.done [#allocation12], 128
    $region57: #{tpu_custom_call.1} parent=1 // pred_fallthru
      _
    %1103 = vsyncpa [#allocation3], 1
    %1104 = vsyncpa [#allocation6], 1
    %1105 = vsyncpa [#allocation9], 1
    %1106 = vsyncpa [#allocation4], 1
    %1107 = vsyncpa [#allocation12], 1

</llo_original>
